<compile_context>
chip_gen: v7x
topology: tpu7x:2x2x1
jax: 0.10.0
libtpu: 0.0.40
codegen_flags: <defaults>
</compile_context>

<pallas_src>
import functools

import jax
import jax.numpy as jnp
from jax.experimental import pallas as pl
from jax.experimental.pallas import tpu as pltpu


def _round_up(x, m):
    return ((x + m - 1) // m) * m


def _supcon_kernel(aid_ref, cid_ref, anchor_ref, contrast_ref, *rest,
                   inv_temp, n_valid_cols, has_pair_mask):
    """One (anchor-tile, contrast-tile) step of SupCon with online LSE.

    aid_ref      : [TM, 1]  int32   id of each anchor row (label or sample idx)
    cid_ref      : [1, TN]  int32   id of each contrast column
    anchor_ref   : [TM, D]  f32     anchor features (zero padded rows)
    contrast_ref : [TN, D]  f32     contrast features (zero padded rows)
    pmask_ref    : [TM, TN] f32     (only if has_pair_mask) tiled base mask
    out_ref      : [TM, 1]  f32     per-anchor-row loss (written at last step)
    scratch      : m, l, sum(mask*logits), sum(mask), each [TM, 1] f32
    """
    if has_pair_mask:
        pmask_ref, out_ref, m_sc, l_sc, sml_sc, sm_sc = rest
    else:
        out_ref, m_sc, l_sc, sml_sc, sm_sc = rest
        pmask_ref = None

    i = pl.program_id(0)
    j = pl.program_id(1)

    @pl.when(j == 0)
    def _():
        m_sc[...] = jnp.full_like(m_sc, -jnp.inf)
        l_sc[...] = jnp.zeros_like(l_sc)
        sml_sc[...] = jnp.zeros_like(sml_sc)
        sm_sc[...] = jnp.zeros_like(sm_sc)

    tm = anchor_ref.shape[0]
    tn = contrast_ref.shape[0]

    # logits tile = (anchor / T) @ contrast^T, MXU, f32 accumulate.
    # 1/T folded into the [TM, D] operand (not the [TM, TN] result);
    # dot_general contracts dim 1 of both sides -> no explicit transpose.
    a_scaled = anchor_ref[...] * inv_temp
    logits = jax.lax.dot_general(
        a_scaled, contrast_ref[...],
        dimension_numbers=(((1,), (1,)), ((), ())),
        preferred_element_type=jnp.float32)                     # [TM, TN]

    # Global row/col indices of this tile (for self-pair and padding masks).
    row_g = i * tm + jax.lax.broadcasted_iota(jnp.int32, (tm, 1), 0)   # [TM,1]
    col_g = j * tn + jax.lax.broadcasted_iota(jnp.int32, (1, tn), 1)   # [1,TN]

    col_valid = col_g < n_valid_cols                              # padded cols -> 0
    lmask_b = jnp.logical_and(row_g != col_g, col_valid)          # [TM, TN] bool
    lmask_f = lmask_b.astype(jnp.float32)

    if has_pair_mask:
        pos_f = pmask_ref[...] * lmask_f
    else:
        pos_f = jnp.logical_and(aid_ref[...] == cid_ref[...], lmask_b)
        pos_f = pos_f.astype(jnp.float32)

    # Online log-sum-exp over the contrast axis (denominator of log_prob).
    tile_max = jnp.max(logits, axis=1, keepdims=True)             # [TM, 1]
    m_new = jnp.maximum(m_sc[...], tile_max)
    l_sc[...] = (l_sc[...] * jnp.exp(m_sc[...] - m_new) +
                 jnp.sum(jnp.exp(logits - m_new) * lmask_f, axis=1, keepdims=True))
    m_sc[...] = m_new

    # Linear accumulators; the max shift is applied algebraically at finalize:
    #   sum(mask*log_prob) = sum(mask*logits) - sum(mask)*(m + log(l))
    sml_sc[...] += jnp.sum(pos_f * logits, axis=1, keepdims=True)
    sm_sc[...] += jnp.sum(pos_f, axis=1, keepdims=True)

    @pl.when(j == pl.num_programs(1) - 1)
    def _():
        log_z = m_sc[...] + jnp.log(l_sc[...])
        sm = sm_sc[...]
        mean_log_prob_pos = sml_sc[...] / jnp.maximum(sm, 1.0) - log_z
        # Rows with zero positive pairs contribute 0 (the PyTorch original
        # produces NaN there; guarded divide per perf-review recommendation).
        out_ref[...] = jnp.where(sm > 0.0, -mean_log_prob_pos, 0.0)


def supcon_loss(features, labels=None, mask=None, *, temperature=0.07,
                contrast_mode='all'):
    """JAX/Pallas port of SupConLoss.forward.

    features: [bsz, n_views, ...] (trailing dims flattened)
    labels:   [bsz] int or None
    mask:     [bsz, bsz] float or None
    """
    if features.ndim < 3:
        raise ValueError('`features` needs to be [bsz, n_views, ...]')
    if features.ndim > 3:
        features = features.reshape(features.shape[0], features.shape[1], -1)

    bsz, n_views, dim = features.shape
    if labels is not None and mask is not None:
        raise ValueError('Cannot define both `labels` and `mask`')

    contrast_count = n_views
    # torch.cat(torch.unbind(features, dim=1), dim=0): view-major concatenation
    contrast_feature = jnp.concatenate(
        [features[:, v, :] for v in range(n_views)], axis=0)      # [N, D]

    if contrast_mode == 'one':
        anchor_feature = features[:, 0, :]
        anchor_count = 1
    elif contrast_mode == 'all':
        anchor_feature = contrast_feature
        anchor_count = contrast_count
    else:
        raise ValueError('Unknown mode: {}'.format(contrast_mode))

    M = anchor_count * bsz
    N = contrast_count * bsz

    # ---- per-row / per-col ids (labels path & SimCLR path) or tiled pair mask
    if mask is not None:
        has_pair_mask = True
        pair_mask = jnp.tile(mask.astype(jnp.float32),
                             (anchor_count, contrast_count))       # [M, N]
        anchor_ids = jnp.zeros((M,), jnp.int32)                    # unused
        contrast_ids = jnp.zeros((N,), jnp.int32)                  # unused
    else:
        has_pair_mask = False
        pair_mask = None
        if labels is None:
            base_ids = jnp.arange(bsz, dtype=jnp.int32)            # SimCLR: eye(bsz)
        else:
            labels = labels.reshape(-1)
            if labels.shape[0] != bsz:
                raise ValueError('Num of labels does not match num of features')
            base_ids = labels.astype(jnp.int32)
        anchor_ids = jnp.tile(base_ids, anchor_count)              # row r -> id[r % bsz]
        contrast_ids = jnp.tile(base_ids, contrast_count)          # col c -> id[c % bsz]

    # ---- lane/sublane friendly padding & tile sizes
    TM = min(256, _round_up(M, 128))
    TN = min(512, _round_up(N, 128))
    M_pad = _round_up(M, TM)
    N_pad = _round_up(N, TN)
    D_pad = _round_up(dim, 128)

    def _pad2(a, r, c):
        return jnp.pad(a, ((0, r - a.shape[0]), (0, c - a.shape[1])))

    anchor_p = _pad2(anchor_feature.astype(jnp.float32), M_pad, D_pad)
    contrast_p = _pad2(contrast_feature.astype(jnp.float32), N_pad, D_pad)
    aid = jnp.pad(anchor_ids, (0, M_pad - M)).reshape(M_pad, 1)
    cid = jnp.pad(contrast_ids, (0, N_pad - N)).reshape(1, N_pad)

    kernel = functools.partial(
        _supcon_kernel,
        inv_temp=float(1.0 / temperature),
        n_valid_cols=int(N),
        has_pair_mask=has_pair_mask)

    in_specs = [
        pl.BlockSpec((TM, 1), lambda i, j: (i, 0)),          # anchor ids
        pl.BlockSpec((1, TN), lambda i, j: (0, j)),          # contrast ids
        pl.BlockSpec((TM, D_pad), lambda i, j: (i, 0)),      # anchor features
        pl.BlockSpec((TN, D_pad), lambda i, j: (j, 0)),      # contrast features
    ]
    args = [aid, cid, anchor_p, contrast_p]
    if has_pair_mask:
        in_specs.append(pl.BlockSpec((TM, TN), lambda i, j: (i, j)))
        args.append(_pad2(pair_mask, M_pad, N_pad))

    grid = (M_pad // TM, N_pad // TN)

    per_row = pl.pallas_call(
        kernel,
        out_shape=jax.ShapeDtypeStruct((M_pad, 1), jnp.float32),
        grid_spec=pltpu.PrefetchScalarGridSpec(
            num_scalar_prefetch=0,
            grid=grid,
            in_specs=in_specs,
            out_specs=pl.BlockSpec((TM, 1), lambda i, j: (i, 0)),
            scratch_shapes=[pltpu.VMEM((TM, 1), jnp.float32)] * 4),
        compiler_params=pltpu.CompilerParams(
            dimension_semantics=("parallel", "arbitrary")),
    )(*args)

    # loss.view(anchor_count, bsz).mean() == mean over the M (unpadded) rows.
    return jnp.mean(per_row[:M, 0])


def _supcon_loss_ref(features, labels=None, mask=None, *, temperature=0.07,
                     contrast_mode='all'):
    """Pure-JAX reference mirroring the PyTorch code (for correctness check)."""
    bsz, n_views, _ = features.shape
    if labels is None and mask is None:
        base_mask = jnp.eye(bsz, dtype=jnp.float32)
    elif labels is not None:
        labels = labels.reshape(-1, 1)
        base_mask = (labels == labels.T).astype(jnp.float32)
    else:
        base_mask = mask.astype(jnp.float32)
    contrast_feature = jnp.concatenate(
        [features[:, v, :] for v in range(n_views)], axis=0)
    if contrast_mode == 'one':
        anchor_feature, anchor_count = features[:, 0, :], 1
    else:
        anchor_feature, anchor_count = contrast_feature, n_views
    logits = jnp.matmul(anchor_feature, contrast_feature.T,
                        precision=jax.lax.Precision.HIGHEST) / temperature
    logits = logits - jnp.max(logits, axis=1, keepdims=True)
    M = anchor_count * bsz
    N = n_views * bsz
    full_mask = jnp.tile(base_mask, (anchor_count, n_views))
    lmask = 1.0 - jnp.eye(M, N, dtype=jnp.float32)
    full_mask = full_mask * lmask
    exp_logits = jnp.exp(logits) * lmask
    log_prob = logits - jnp.log(exp_logits.sum(1, keepdims=True))
    mean_log_prob_pos = (full_mask * log_prob).sum(1) / full_mask.sum(1)
    return jnp.mean(-mean_log_prob_pos)


if __name__ == "__main__":
    key = jax.random.PRNGKey(0)
    k_feat, k_lab = jax.random.split(key)

    bsz, n_views, dim = 8, 2, 32
    # features as produced upstream (typically L2-normalized embeddings)
    feats = jax.random.normal(k_feat, (bsz, n_views, dim), dtype=jnp.float32)
    feats = feats / jnp.linalg.norm(feats, axis=-1, keepdims=True)
    labels = jax.random.randint(k_lab, (bsz,), 0, 3)
    pair_mask = (labels[:, None] == labels[None, :]).astype(jnp.float32)

    cases = [
        (dict(labels=labels), dict(labels=labels)),                       # supervised
        (dict(), dict()),                                                 # SimCLR
        (dict(mask=pair_mask), dict(mask=pair_mask)),                     # explicit mask
        (dict(labels=labels, contrast_mode='one'),
         dict(labels=labels, contrast_mode='one')),                       # 'one' mode
    ]

    for kern_kwargs, ref_kwargs in cases:
        got = supcon_loss(feats, temperature=0.07, **kern_kwargs)
        got = jax.block_until_ready(got)
        ref = _supcon_loss_ref(feats, temperature=0.07, **ref_kwargs)
        assert jnp.allclose(got, ref, rtol=1e-4, atol=1e-4), (kern_kwargs, got, ref)

    print("KERNEL_OK")
</pallas_src>

<mosaic_0001>
module attributes {stable_mosaic.version = 11 : i64} {
  func.func @_supcon_kernel(%arg0: i32, %arg1: i32, %arg2: memref<128x1xi32, #tpu.memory_space<vmem>>, %arg3: memref<1x128xi32, #tpu.memory_space<vmem>>, %arg4: memref<128x128xf32, #tpu.memory_space<vmem>>, %arg5: memref<128x128xf32, #tpu.memory_space<vmem>>, %arg6: memref<128x1xf32, #tpu.memory_space<vmem>>, %arg7: memref<128x1xf32, #tpu.memory_space<vmem>>, %arg8: memref<128x1xf32, #tpu.memory_space<vmem>>, %arg9: memref<128x1xf32, #tpu.memory_space<vmem>>, %arg10: memref<128x1xf32, #tpu.memory_space<vmem>>) attributes {dimension_semantics = [#tpu.dimension_semantics<parallel>, #tpu.dimension_semantics<arbitrary>], iteration_bounds = array<i64: 1, 1>, scalar_prefetch = 0 : i64, scratch_operands = 4 : i64, tpu.core_type = #tpu.core_type<tc>, window_params = [{transform_indices = @transform_0, window_bounds = array<i64: 128, 1>}, {transform_indices = @transform_1, window_bounds = array<i64: 1, 128>}, {transform_indices = @transform_2, window_bounds = array<i64: 128, 128>}, {transform_indices = @transform_3, window_bounds = array<i64: 128, 128>}, {transform_indices = @transform_4, window_bounds = array<i64: 128, 1>}]} {
    %c0_i32 = arith.constant 0 : i32
    %0 = arith.cmpi eq, %arg1, %c0_i32 : i32
    %1 = arith.extui %0 : i1 to i32
    %c0_i32_0 = arith.constant 0 : i32
    %2 = arith.cmpi ne, %1, %c0_i32_0 : i32
    scf.if %2 {
      %cst_34 = arith.constant 0xFF800000 : f32
      %65 = vector.broadcast %cst_34 : f32 to vector<128x1xf32>
      %c0_35 = arith.constant 0 : index
      %c0_36 = arith.constant 0 : index
      %66 = vector.load %arg7[%c0_35, %c0_36] : memref<128x1xf32, #tpu.memory_space<vmem>>, vector<128x1xf32>
      tpu.vector_store %arg7[%c0_35, %c0_36], %65 {strides = array<i32>} : memref<128x1xf32, #tpu.memory_space<vmem>>, vector<128x1xf32>,
      %cst_37 = arith.constant 0.000000e+00 : f32
      %67 = vector.broadcast %cst_37 : f32 to vector<128x1xf32>
      %c0_38 = arith.constant 0 : index
      %c0_39 = arith.constant 0 : index
      %68 = vector.load %arg8[%c0_38, %c0_39] : memref<128x1xf32, #tpu.memory_space<vmem>>, vector<128x1xf32>
      tpu.vector_store %arg8[%c0_38, %c0_39], %67 {strides = array<i32>} : memref<128x1xf32, #tpu.memory_space<vmem>>, vector<128x1xf32>,
      %cst_40 = arith.constant 0.000000e+00 : f32
      %69 = vector.broadcast %cst_40 : f32 to vector<128x1xf32>
      %c0_41 = arith.constant 0 : index
      %c0_42 = arith.constant 0 : index
      %70 = vector.load %arg9[%c0_41, %c0_42] : memref<128x1xf32, #tpu.memory_space<vmem>>, vector<128x1xf32>
      tpu.vector_store %arg9[%c0_41, %c0_42], %69 {strides = array<i32>} : memref<128x1xf32, #tpu.memory_space<vmem>>, vector<128x1xf32>,
      %cst_43 = arith.constant 0.000000e+00 : f32
      %71 = vector.broadcast %cst_43 : f32 to vector<128x1xf32>
      %c0_44 = arith.constant 0 : index
      %c0_45 = arith.constant 0 : index
      %72 = vector.load %arg10[%c0_44, %c0_45] : memref<128x1xf32, #tpu.memory_space<vmem>>, vector<128x1xf32>
      tpu.vector_store %arg10[%c0_44, %c0_45], %71 {strides = array<i32>} : memref<128x1xf32, #tpu.memory_space<vmem>>, vector<128x1xf32>,
    } else {
    }
    %c0 = arith.constant 0 : index
    %c0_1 = arith.constant 0 : index
    %3 = vector.load %arg4[%c0, %c0_1] : memref<128x128xf32, #tpu.memory_space<vmem>>, vector<128x128xf32>
    %cst = arith.constant 14.2857141 : f32
    %4 = vector.broadcast %cst : f32 to vector<128x128xf32>
    %5 = arith.mulf %3, %4 : vector<128x128xf32>
    %c0_2 = arith.constant 0 : index
    %c0_3 = arith.constant 0 : index
    %6 = vector.load %arg5[%c0_2, %c0_3] : memref<128x128xf32, #tpu.memory_space<vmem>>, vector<128x128xf32>
    %cst_4 = arith.constant dense<0.000000e+00> : vector<128x128xf32>
    %7 = tpu.matmul %5, %6, %cst_4 {dimension_numbers = #tpu.dot_dimension_numbers<[1], [1], [0], [0], [0, 0, 1, 0], [], []>} : vector<128x128xf32>, vector<128x128xf32>, vector<128x128xf32> -> vector<128x128xf32>
    %c128_i32 = arith.constant 128 : i32
    %8 = arith.muli %arg0, %c128_i32 : i32
    %9 = tpu.iota {dimensions = array<i32: 0>} : vector<128x1xi32>
    %10 = vector.broadcast %8 : i32 to vector<128x1xi32>
    %11 = arith.addi %10, %9 : vector<128x1xi32>
    %c128_i32_5 = arith.constant 128 : i32
    %12 = arith.muli %arg1, %c128_i32_5 : i32
    %13 = tpu.iota {dimensions = array<i32: 1>} : vector<1x128xi32>
    %14 = vector.broadcast %12 : i32 to vector<1x128xi32>
    %15 = arith.addi %14, %13 : vector<1x128xi32>
    %c16_i32 = arith.constant 16 : i32
    %16 = vector.broadcast %c16_i32 : i32 to vector<1x128xi32>
    %17 = arith.cmpi slt, %15, %16 : vector<1x128xi32>
    %18 = vector.broadcast %11 : vector<128x1xi32> to vector<128x128xi32>
    %19 = vector.broadcast %15 : vector<1x128xi32> to vector<128x128xi32>
    %20 = arith.cmpi ne, %18, %19 : vector<128x128xi32>
    %21 = vector.broadcast %17 : vector<1x128xi1> to vector<128x128xi1>
    %22 = arith.andi %20, %21 : vector<128x128xi1>
    %23 = arith.extui %22 : vector<128x128xi1> to vector<128x128xi32>
    %24 = arith.sitofp %23 : vector<128x128xi32> to vector<128x128xf32>
    %c0_6 = arith.constant 0 : index
    %c0_7 = arith.constant 0 : index
    %25 = vector.load %arg2[%c0_6, %c0_7] : memref<128x1xi32, #tpu.memory_space<vmem>>, vector<128x1xi32>
    %c0_8 = arith.constant 0 : index
    %c0_9 = arith.constant 0 : index
    %26 = vector.load %arg3[%c0_8, %c0_9] : memref<1x128xi32, #tpu.memory_space<vmem>>, vector<1x128xi32>
    %27 = vector.broadcast %25 : vector<128x1xi32> to vector<128x128xi32>
    %28 = vector.broadcast %26 : vector<1x128xi32> to vector<128x128xi32>
    %29 = arith.cmpi eq, %27, %28 : vector<128x128xi32>
    %30 = arith.andi %29, %22 : vector<128x128xi1>
    %31 = arith.extui %30 : vector<128x128xi1> to vector<128x128xi32>
    %32 = arith.sitofp %31 : vector<128x128xi32> to vector<128x128xf32>
    %cst_10 = arith.constant dense<0xFF800000> : vector<128xf32>
    %33 = vector.multi_reduction <maximumf>, %7, %cst_10 [1] : vector<128x128xf32> to vector<128xf32>
    %34 = vector.shape_cast %33 : vector<128xf32> to vector<128x1xf32>
    %c0_11 = arith.constant 0 : index
    %c0_12 = arith.constant 0 : index
    %35 = vector.load %arg7[%c0_11, %c0_12] : memref<128x1xf32, #tpu.memory_space<vmem>>, vector<128x1xf32>
    %36 = arith.maximumf %35, %34 : vector<128x1xf32>
    %c0_13 = arith.constant 0 : index
    %c0_14 = arith.constant 0 : index
    %37 = vector.load %arg8[%c0_13, %c0_14] : memref<128x1xf32, #tpu.memory_space<vmem>>, vector<128x1xf32>
    %c0_15 = arith.constant 0 : index
    %c0_16 = arith.constant 0 : index
    %38 = vector.load %arg7[%c0_15, %c0_16] : memref<128x1xf32, #tpu.memory_space<vmem>>, vector<128x1xf32>
    %39 = arith.subf %38, %36 : vector<128x1xf32>
    %40 = math.exp %39 : vector<128x1xf32>
    %41 = arith.mulf %37, %40 : vector<128x1xf32>
    %42 = vector.broadcast %36 : vector<128x1xf32> to vector<128x128xf32>
    %43 = arith.subf %7, %42 : vector<128x128xf32>
    %44 = math.exp %43 : vector<128x128xf32>
    %45 = arith.mulf %44, %24 : vector<128x128xf32>
    %cst_17 = arith.constant dense<0.000000e+00> : vector<128xf32>
    %46 = vector.multi_reduction <add>, %45, %cst_17 [1] : vector<128x128xf32> to vector<128xf32>
    %47 = vector.shape_cast %46 : vector<128xf32> to vector<128x1xf32>
    %48 = arith.addf %41, %47 : vector<128x1xf32>
    %c0_18 = arith.constant 0 : index
    %c0_19 = arith.constant 0 : index
    %49 = vector.load %arg8[%c0_18, %c0_19] : memref<128x1xf32, #tpu.memory_space<vmem>>, vector<128x1xf32>
    tpu.vector_store %arg8[%c0_18, %c0_19], %48 {strides = array<i32>} : memref<128x1xf32, #tpu.memory_space<vmem>>, vector<128x1xf32>,
    %c0_20 = arith.constant 0 : index
    %c0_21 = arith.constant 0 : index
    %50 = vector.load %arg7[%c0_20, %c0_21] : memref<128x1xf32, #tpu.memory_space<vmem>>, vector<128x1xf32>
    tpu.vector_store %arg7[%c0_20, %c0_21], %36 {strides = array<i32>} : memref<128x1xf32, #tpu.memory_space<vmem>>, vector<128x1xf32>,
    %c0_22 = arith.constant 0 : index
    %c0_23 = arith.constant 0 : index
    %51 = vector.load %arg9[%c0_22, %c0_23] : memref<128x1xf32, #tpu.memory_space<vmem>>, vector<128x1xf32>
    %52 = arith.mulf %32, %7 : vector<128x128xf32>
    %cst_24 = arith.constant dense<0.000000e+00> : vector<128xf32>
    %53 = vector.multi_reduction <add>, %52, %cst_24 [1] : vector<128x128xf32> to vector<128xf32>
    %54 = vector.shape_cast %53 : vector<128xf32> to vector<128x1xf32>
    %55 = arith.addf %51, %54 : vector<128x1xf32>
    %c0_25 = arith.constant 0 : index
    %c0_26 = arith.constant 0 : index
    %56 = vector.load %arg9[%c0_25, %c0_26] : memref<128x1xf32, #tpu.memory_space<vmem>>, vector<128x1xf32>
    tpu.vector_store %arg9[%c0_25, %c0_26], %55 {strides = array<i32>} : memref<128x1xf32, #tpu.memory_space<vmem>>, vector<128x1xf32>,
    %c0_27 = arith.constant 0 : index
    %c0_28 = arith.constant 0 : index
    %57 = vector.load %arg10[%c0_27, %c0_28] : memref<128x1xf32, #tpu.memory_space<vmem>>, vector<128x1xf32>
    %cst_29 = arith.constant dense<0.000000e+00> : vector<128xf32>
    %58 = vector.multi_reduction <add>, %32, %cst_29 [1] : vector<128x128xf32> to vector<128xf32>
    %59 = vector.shape_cast %58 : vector<128xf32> to vector<128x1xf32>
    %60 = arith.addf %57, %59 : vector<128x1xf32>
    %c0_30 = arith.constant 0 : index
    %c0_31 = arith.constant 0 : index
    %61 = vector.load %arg10[%c0_30, %c0_31] : memref<128x1xf32, #tpu.memory_space<vmem>>, vector<128x1xf32>
    tpu.vector_store %arg10[%c0_30, %c0_31], %60 {strides = array<i32>} : memref<128x1xf32, #tpu.memory_space<vmem>>, vector<128x1xf32>,
    %c0_i32_32 = arith.constant 0 : i32
    %62 = arith.cmpi eq, %arg1, %c0_i32_32 : i32
    %63 = arith.extui %62 : i1 to i32
    %c0_i32_33 = arith.constant 0 : i32
    %64 = arith.cmpi ne, %63, %c0_i32_33 : i32
    scf.if %64 {
      %c0_34 = arith.constant 0 : index
      %c0_35 = arith.constant 0 : index
      %65 = vector.load %arg7[%c0_34, %c0_35] : memref<128x1xf32, #tpu.memory_space<vmem>>, vector<128x1xf32>
      %c0_36 = arith.constant 0 : index
      %c0_37 = arith.constant 0 : index
      %66 = vector.load %arg8[%c0_36, %c0_37] : memref<128x1xf32, #tpu.memory_space<vmem>>, vector<128x1xf32>
      %67 = math.log %66 : vector<128x1xf32>
      %68 = arith.addf %65, %67 : vector<128x1xf32>
      %c0_38 = arith.constant 0 : index
      %c0_39 = arith.constant 0 : index
      %69 = vector.load %arg10[%c0_38, %c0_39] : memref<128x1xf32, #tpu.memory_space<vmem>>, vector<128x1xf32>
      %c0_40 = arith.constant 0 : index
      %c0_41 = arith.constant 0 : index
      %70 = vector.load %arg9[%c0_40, %c0_41] : memref<128x1xf32, #tpu.memory_space<vmem>>, vector<128x1xf32>
      %cst_42 = arith.constant 1.000000e+00 : f32
      %71 = vector.broadcast %cst_42 : f32 to vector<128x1xf32>
      %72 = arith.maximumf %69, %71 : vector<128x1xf32>
      %73 = arith.divf %70, %72 : vector<128x1xf32>
      %74 = arith.subf %73, %68 : vector<128x1xf32>
      %cst_43 = arith.constant 0.000000e+00 : f32
      %75 = vector.broadcast %cst_43 : f32 to vector<128x1xf32>
      %76 = arith.cmpf ogt, %69, %75 : vector<128x1xf32>
      %cst_44 = arith.constant 0.000000e+00 : f32
      %77 = vector.broadcast %cst_44 : f32 to vector<128x1xf32>
      %78 = arith.subf %77, %74 : vector<128x1xf32>
      %cst_45 = arith.constant 0.000000e+00 : f32
      %79 = vector.broadcast %cst_45 : f32 to vector<128x1xf32>
      %80 = arith.select %76, %78, %79 : vector<128x1xi1>, vector<128x1xf32>
      %c0_46 = arith.constant 0 : index
      %c0_47 = arith.constant 0 : index
      %81 = vector.load %arg6[%c0_46, %c0_47] : memref<128x1xf32, #tpu.memory_space<vmem>>, vector<128x1xf32>
      tpu.vector_store %arg6[%c0_46, %c0_47], %80 {strides = array<i32>} : memref<128x1xf32, #tpu.memory_space<vmem>>, vector<128x1xf32>,
    } else {
    }
    return
  }
  func.func @transform_0(%arg0: i32, %arg1: i32) -> (i32, i32) {
    %c0_i32 = arith.constant 0 : i32
    %c0_i32_0 = arith.constant 0 : i32
    return %arg0, %c0_i32 : i32, i32
  }
  func.func @transform_1(%arg0: i32, %arg1: i32) -> (i32, i32) {
    %c0_i32 = arith.constant 0 : i32
    %c0_i32_0 = arith.constant 0 : i32
    return %c0_i32, %arg1 : i32, i32
  }
  func.func @transform_2(%arg0: i32, %arg1: i32) -> (i32, i32) {
    %c0_i32 = arith.constant 0 : i32
    %c0_i32_0 = arith.constant 0 : i32
    return %arg0, %c0_i32 : i32, i32
  }
  func.func @transform_3(%arg0: i32, %arg1: i32) -> (i32, i32) {
    %c0_i32 = arith.constant 0 : i32
    %c0_i32_0 = arith.constant 0 : i32
    return %arg1, %c0_i32 : i32, i32
  }
  func.func @transform_4(%arg0: i32, %arg1: i32) -> (i32, i32) {
    %c0_i32 = arith.constant 0 : i32
    %c0_i32_0 = arith.constant 0 : i32
    return %arg0, %c0_i32 : i32, i32
  }
}

</mosaic_0001>

<llo_original>
// kernel: tpu_custom_call.1
$region0: #{tpu_custom_call.1}
  #allocation0 [shape = 'u32[]', space=smem, size = 0x4, offset = 0x4, fixed_abs, tag = 'smem constant byte address 0x4 - core index']
  #allocation1 [shape = 'u32[144,128]{1,0:T(1,128)}', space=vmem, size = 0x12000, scoped, tag = 'internal scratch']
  #allocation2 [shape = 'f32[128,1]{1,0:T(8,128)}', space=vmem, size = 0x10000, scoped, tag = 'scratch operand']
  #allocation3 [shape = 'f32[128,1]{1,0:T(8,128)}', space=vmem, size = 0x10000, scoped, tag = 'scratch operand']
  #allocation4 [shape = 'f32[128,1]{1,0:T(8,128)}', space=vmem, size = 0x10000, scoped, tag = 'scratch operand']
  #allocation5 [shape = 'f32[128,1]{1,0:T(8,128)}', space=vmem, size = 0x10000, scoped, tag = 'scratch operand']
  %s0 = inlined_call_operand.vmem [shape: s32[128,1], index: 0, kind: input, shape index: {}]
  %s1 = inlined_call_operand.vmem [shape: s32[1,128], index: 1, kind: input, shape index: {}]
  %s2 = inlined_call_operand.vmem [shape: f32[128,128], index: 2, kind: input, shape index: {}]
  %s3 = inlined_call_operand.hbm [shape: f32[128,128], index: 3, kind: input, shape index: {}]
  %s4 = inlined_call_operand.vmem [shape: f32[128,1], index: 4, kind: output, shape index: {}]
  %s5 = sld [smem:[#allocation0]]
  $region38: #{tpu_custom_call.1} parent=0
    _
  %s7 = ssub.s32 1, %s5
  %s8 = scalar_select 0, %s7, %s5
  $region1: #{tpu_custom_call.1} parent=0
    #allocation6 [shape = 'u8[65536]{0}', space=vmem, size = 0x10000, scoped, tag = 'input window, operand 3, single buffered']
    #allocation7 [shape = 's32[1]{0}', space=sflag, size = 0x4, scoped, tag = 'scoped memory for tpu_custom_call.1']
    %9 = vsyncpa [#allocation7], 0
    // Predicated region
    $region2: #{tpu_custom_call.1} parent=1 // pred_check
      _
    $region3: #{tpu_custom_call.1} parent=1 // pred_check_branch
      %11 = sbr.rel (0) target = $region5
    $region4: #{tpu_custom_call.1} parent=1 // pred_region
      _
    $region5: #{tpu_custom_call.1} parent=1 // pred_fallthru
      _
    // Predicated region
    $region6: #{tpu_custom_call.1} parent=1 // pred_check
      _
    $region7: #{tpu_custom_call.1} parent=1 // pred_check_branch
      %13 = sbr.rel (0) target = $region9
    $region8: #{tpu_custom_call.1} parent=1 // pred_region
      _
    $region9: #{tpu_custom_call.1} parent=1 // pred_fallthru
      _
    // Predicated region
    $region10: #{tpu_custom_call.1} parent=1 // pred_check
      _
    $region11: #{tpu_custom_call.1} parent=1 // pred_check_branch
      %15 = sbr.rel (0) target = $region13
    $region12: #{tpu_custom_call.1} parent=1 // pred_region
      _
    $region13: #{tpu_custom_call.1} parent=1 // pred_fallthru
      _
    // Predicated region
    $region14: #{tpu_custom_call.1} parent=1 // pred_check
      _
    $region15: #{tpu_custom_call.1} parent=1 // pred_check_branch
      %17 = sbr.rel (0) target = $region17
    $region16: #{tpu_custom_call.1} parent=1 // pred_region
      %s19 = ssub.s32 2048, 2048
      %20 = vsyncadd [#allocation7], %s19
      %s21 = sshll.u32 [#allocation6], 4
      %s22 = int_to_ptr.vmem [resolvable:$true] %s21
      %27 = dma.hbm_to_vmem [thread:$0]  %s3, 2048, %s22, [#allocation7], 128, 128, 8
    $region17: #{tpu_custom_call.1} parent=1 // pred_fallthru
      _
    // Predicated region
    $region18: #{tpu_custom_call.1} parent=1 // pred_check
      _
    $region19: #{tpu_custom_call.1} parent=1 // pred_check_branch
      %29 = sbr.rel (0) target = $region21
    $region20: #{tpu_custom_call.1} parent=1 // pred_region
      %30 = dma.done [#allocation7], 2048
    $region21: #{tpu_custom_call.1} parent=1 // pred_fallthru
      _
    %p31 = scmp.eq.s32.totalorder 0, 0
    // Predicated region
    $region22: #{tpu_custom_call.1} parent=1 // pred_check
      %p32 = pneg %p31
    $region23: #{tpu_custom_call.1} parent=1 // pred_check_branch
      %34 = sbr.rel (%p32) target = $region25
    $region24: #{tpu_custom_call.1} parent=1 // pred_region
      %vm35 = vcmask 7168
      %36 = vst.msk [vmem:[#allocation2] sm:$0xff] %vm35, -inf
      %37 = vst.msk [vmem:[#allocation2 + $0x8] sm:$0xff] %vm35, -inf
      %38 = vst.msk [vmem:[#allocation2 + $0x10] sm:$0xff] %vm35, -inf
      %39 = vst.msk [vmem:[#allocation2 + $0x18] sm:$0xff] %vm35, -inf
      %40 = vst.msk [vmem:[#allocation2 + $0x20] sm:$0xff] %vm35, -inf
      %41 = vst.msk [vmem:[#allocation2 + $0x28] sm:$0xff] %vm35, -inf
      %42 = vst.msk [vmem:[#allocation2 + $0x30] sm:$0xff] %vm35, -inf
      %43 = vst.msk [vmem:[#allocation2 + $0x38] sm:$0xff] %vm35, -inf
      %44 = vst.msk [vmem:[#allocation2 + $0x40] sm:$0xff] %vm35, -inf
      %45 = vst.msk [vmem:[#allocation2 + $0x48] sm:$0xff] %vm35, -inf
      %46 = vst.msk [vmem:[#allocation2 + $0x50] sm:$0xff] %vm35, -inf
      %47 = vst.msk [vmem:[#allocation2 + $0x58] sm:$0xff] %vm35, -inf
      %48 = vst.msk [vmem:[#allocation2 + $0x60] sm:$0xff] %vm35, -inf
      %49 = vst.msk [vmem:[#allocation2 + $0x68] sm:$0xff] %vm35, -inf
      %50 = vst.msk [vmem:[#allocation2 + $0x70] sm:$0xff] %vm35, -inf
      %51 = vst.msk [vmem:[#allocation2 + $0x78] sm:$0xff] %vm35, -inf
      %52 = vst.msk [vmem:[#allocation3] sm:$0xff] %vm35, 0.0
      %53 = vst.msk [vmem:[#allocation3 + $0x8] sm:$0xff] %vm35, 0.0
      %54 = vst.msk [vmem:[#allocation3 + $0x10] sm:$0xff] %vm35, 0.0
      %55 = vst.msk [vmem:[#allocation3 + $0x18] sm:$0xff] %vm35, 0.0
      %56 = vst.msk [vmem:[#allocation3 + $0x20] sm:$0xff] %vm35, 0.0
      %57 = vst.msk [vmem:[#allocation3 + $0x28] sm:$0xff] %vm35, 0.0
      %58 = vst.msk [vmem:[#allocation3 + $0x30] sm:$0xff] %vm35, 0.0
      %59 = vst.msk [vmem:[#allocation3 + $0x38] sm:$0xff] %vm35, 0.0
      %60 = vst.msk [vmem:[#allocation3 + $0x40] sm:$0xff] %vm35, 0.0
      %61 = vst.msk [vmem:[#allocation3 + $0x48] sm:$0xff] %vm35, 0.0
      %62 = vst.msk [vmem:[#allocation3 + $0x50] sm:$0xff] %vm35, 0.0
      %63 = vst.msk [vmem:[#allocation3 + $0x58] sm:$0xff] %vm35, 0.0
      %64 = vst.msk [vmem:[#allocation3 + $0x60] sm:$0xff] %vm35, 0.0
      %65 = vst.msk [vmem:[#allocation3 + $0x68] sm:$0xff] %vm35, 0.0
      %66 = vst.msk [vmem:[#allocation3 + $0x70] sm:$0xff] %vm35, 0.0
      %67 = vst.msk [vmem:[#allocation3 + $0x78] sm:$0xff] %vm35, 0.0
      %68 = vst.msk [vmem:[#allocation4] sm:$0xff] %vm35, 0.0
      %69 = vst.msk [vmem:[#allocation4 + $0x8] sm:$0xff] %vm35, 0.0
      %70 = vst.msk [vmem:[#allocation4 + $0x10] sm:$0xff] %vm35, 0.0
      %71 = vst.msk [vmem:[#allocation4 + $0x18] sm:$0xff] %vm35, 0.0
      %72 = vst.msk [vmem:[#allocation4 + $0x20] sm:$0xff] %vm35, 0.0
      %73 = vst.msk [vmem:[#allocation4 + $0x28] sm:$0xff] %vm35, 0.0
      %74 = vst.msk [vmem:[#allocation4 + $0x30] sm:$0xff] %vm35, 0.0
      %75 = vst.msk [vmem:[#allocation4 + $0x38] sm:$0xff] %vm35, 0.0
      %76 = vst.msk [vmem:[#allocation4 + $0x40] sm:$0xff] %vm35, 0.0
      %77 = vst.msk [vmem:[#allocation4 + $0x48] sm:$0xff] %vm35, 0.0
      %78 = vst.msk [vmem:[#allocation4 + $0x50] sm:$0xff] %vm35, 0.0
      %79 = vst.msk [vmem:[#allocation4 + $0x58] sm:$0xff] %vm35, 0.0
      %80 = vst.msk [vmem:[#allocation4 + $0x60] sm:$0xff] %vm35, 0.0
      %81 = vst.msk [vmem:[#allocation4 + $0x68] sm:$0xff] %vm35, 0.0
      %82 = vst.msk [vmem:[#allocation4 + $0x70] sm:$0xff] %vm35, 0.0
      %83 = vst.msk [vmem:[#allocation4 + $0x78] sm:$0xff] %vm35, 0.0
      %84 = vst.msk [vmem:[#allocation5] sm:$0xff] %vm35, 0.0
      %85 = vst.msk [vmem:[#allocation5 + $0x8] sm:$0xff] %vm35, 0.0
      %86 = vst.msk [vmem:[#allocation5 + $0x10] sm:$0xff] %vm35, 0.0
      %87 = vst.msk [vmem:[#allocation5 + $0x18] sm:$0xff] %vm35, 0.0
      %88 = vst.msk [vmem:[#allocation5 + $0x20] sm:$0xff] %vm35, 0.0
      %89 = vst.msk [vmem:[#allocation5 + $0x28] sm:$0xff] %vm35, 0.0
      %90 = vst.msk [vmem:[#allocation5 + $0x30] sm:$0xff] %vm35, 0.0
      %91 = vst.msk [vmem:[#allocation5 + $0x38] sm:$0xff] %vm35, 0.0
      %92 = vst.msk [vmem:[#allocation5 + $0x40] sm:$0xff] %vm35, 0.0
      %93 = vst.msk [vmem:[#allocation5 + $0x48] sm:$0xff] %vm35, 0.0
      %94 = vst.msk [vmem:[#allocation5 + $0x50] sm:$0xff] %vm35, 0.0
      %95 = vst.msk [vmem:[#allocation5 + $0x58] sm:$0xff] %vm35, 0.0
      %96 = vst.msk [vmem:[#allocation5 + $0x60] sm:$0xff] %vm35, 0.0
      %97 = vst.msk [vmem:[#allocation5 + $0x68] sm:$0xff] %vm35, 0.0
      %98 = vst.msk [vmem:[#allocation5 + $0x70] sm:$0xff] %vm35, 0.0
      %99 = vst.msk [vmem:[#allocation5 + $0x78] sm:$0xff] %vm35, 0.0
    $region25: #{tpu_custom_call.1} parent=1 // pred_fallthru
      _
    %v100 = vld [vmem:[%s2] sm:$0xff]
    %v101 = vld [vmem:[%s2 + $0x8] sm:$0xff]
    %v102 = vld [vmem:[%s2 + $0x10] sm:$0xff]
    %v103 = vld [vmem:[%s2 + $0x18] sm:$0xff]
    %v104 = vld [vmem:[%s2 + $0x20] sm:$0xff]
    %v105 = vld [vmem:[%s2 + $0x28] sm:$0xff]
    %v106 = vld [vmem:[%s2 + $0x30] sm:$0xff]
    %v107 = vld [vmem:[%s2 + $0x38] sm:$0xff]
    %v108 = vld [vmem:[%s2 + $0x40] sm:$0xff]
    %v109 = vld [vmem:[%s2 + $0x48] sm:$0xff]
    %v110 = vld [vmem:[%s2 + $0x50] sm:$0xff]
    %v111 = vld [vmem:[%s2 + $0x58] sm:$0xff]
    %v112 = vld [vmem:[%s2 + $0x60] sm:$0xff]
    %v113 = vld [vmem:[%s2 + $0x68] sm:$0xff]
    %v114 = vld [vmem:[%s2 + $0x70] sm:$0xff]
    %v115 = vld [vmem:[%s2 + $0x78] sm:$0xff]
    %v116 = vmul.f32 %v100, 14.285714
    %v117 = vmul.f32 %v101, 14.285714
    %v118 = vmul.f32 %v102, 14.285714
    %v119 = vmul.f32 %v103, 14.285714
    %v120 = vmul.f32 %v104, 14.285714
    %v121 = vmul.f32 %v105, 14.285714
    %v122 = vmul.f32 %v106, 14.285714
    %v123 = vmul.f32 %v107, 14.285714
    %v124 = vmul.f32 %v108, 14.285714
    %v125 = vmul.f32 %v109, 14.285714
    %v126 = vmul.f32 %v110, 14.285714
    %v127 = vmul.f32 %v111, 14.285714
    %v128 = vmul.f32 %v112, 14.285714
    %v129 = vmul.f32 %v113, 14.285714
    %v130 = vmul.f32 %v114, 14.285714
    %v131 = vmul.f32 %v115, 14.285714
    %v132 = vld [vmem:[#allocation6] sm:$0xff]
    %v133 = vld [vmem:[#allocation6 + $0x8] sm:$0xff]
    %v134 = vld [vmem:[#allocation6 + $0x10] sm:$0xff]
    %v135 = vld [vmem:[#allocation6 + $0x18] sm:$0xff]
    %v136 = vld [vmem:[#allocation6 + $0x20] sm:$0xff]
    %v137 = vld [vmem:[#allocation6 + $0x28] sm:$0xff]
    %v138 = vld [vmem:[#allocation6 + $0x30] sm:$0xff]
    %v139 = vld [vmem:[#allocation6 + $0x38] sm:$0xff]
    %v140 = vld [vmem:[#allocation6 + $0x40] sm:$0xff]
    %v141 = vld [vmem:[#allocation6 + $0x48] sm:$0xff]
    %v142 = vld [vmem:[#allocation6 + $0x50] sm:$0xff]
    %v143 = vld [vmem:[#allocation6 + $0x58] sm:$0xff]
    %v144 = vld [vmem:[#allocation6 + $0x60] sm:$0xff]
    %v145 = vld [vmem:[#allocation6 + $0x68] sm:$0xff]
    %v146 = vld [vmem:[#allocation6 + $0x70] sm:$0xff]
    %v147 = vld [vmem:[#allocation6 + $0x78] sm:$0xff]
    %148 = vmatprep.subr.mxu0 0.0
    %149 = vmatpush1.xpose.msra.mxu0 %v132
    %150 = vmatprep.subr.mxu0 0.0
    %151 = vmatpush1.xpose.msra.mxu0 %v133
    %152 = vmatprep.subr.mxu0 0.0
    %153 = vmatpush1.xpose.msra.mxu0 %v134
    %154 = vmatprep.subr.mxu0 0.0
    %155 = vmatpush1.xpose.msra.mxu0 %v135
    %156 = vmatprep.subr.mxu0 0.0
    %157 = vmatpush1.xpose.msra.mxu0 %v136
    %158 = vmatprep.subr.mxu0 0.0
    %159 = vmatpush1.xpose.msra.mxu0 %v137
    %160 = vmatprep.subr.mxu0 0.0
    %161 = vmatpush1.xpose.msra.mxu0 %v138
    %162 = vmatprep.subr.mxu0 0.0
    %163 = vmatpush1.xpose.msra.mxu0 %v139
    %164 = vmatprep.subr.mxu0 0.0
    %165 = vmatpush1.xpose.msra.mxu0 %v140
    %166 = vmatprep.subr.mxu0 0.0
    %167 = vmatpush1.xpose.msra.mxu0 %v141
    %168 = vmatprep.subr.mxu0 0.0
    %169 = vmatpush1.xpose.msra.mxu0 %v142
    %170 = vmatprep.subr.mxu0 0.0
    %171 = vmatpush1.xpose.msra.mxu0 %v143
    %172 = vmatprep.subr.mxu0 0.0
    %173 = vmatpush1.xpose.msra.mxu0 %v144
    %174 = vmatprep.subr.mxu0 0.0
    %175 = vmatpush1.xpose.msra.mxu0 %v145
    %176 = vmatprep.subr.mxu0 0.0
    %177 = vmatpush1.xpose.msra.mxu0 %v146
    %178 = vmatprep.subr.mxu0 0.0
    %179 = vmatpush1.xpose.msra.mxu0 %v147
    %180 = vmatprep.subr.mxu0 0.0
    %181 = vmatpush1.xpose.msra.mxu0 0.0
    %182 = vmatprep.subr.mxu0 0.0
    %183 = vmatpush1.xpose.msra.mxu0 0.0
    %184 = vmatprep.subr.mxu0 0.0
    %185 = vmatpush1.xpose.msra.mxu0 0.0
    %186 = vmatprep.subr.mxu0 0.0
    %187 = vmatpush1.xpose.msra.mxu0 0.0
    %188 = vmatprep.subr.mxu0 0.0
    %189 = vmatpush1.xpose.msra.mxu0 0.0
    %190 = vmatprep.subr.mxu0 0.0
    %191 = vmatpush1.xpose.msra.mxu0 0.0
    %192 = vmatprep.subr.mxu0 0.0
    %193 = vmatpush1.xpose.msra.mxu0 0.0
    %194 = vmatprep.subr.mxu0 0.0
    %195 = vmatpush1.xpose.msra.mxu0 0.0
    %196 = vmatprep.subr.mxu0 0.0
    %197 = vmatpush1.xpose.msra.mxu0 0.0
    %198 = vmatprep.subr.mxu0 0.0
    %199 = vmatpush1.xpose.msra.mxu0 0.0
    %200 = vmatprep.subr.mxu0 0.0
    %201 = vmatpush1.xpose.msra.mxu0 0.0
    %202 = vmatprep.subr.mxu0 0.0
    %203 = vmatpush1.xpose.msra.mxu0 0.0
    %204 = vmatprep.subr.mxu0 0.0
    %205 = vmatpush1.xpose.msra.mxu0 0.0
    %206 = vmatprep.subr.mxu0 0.0
    %207 = vmatpush1.xpose.msra.mxu0 0.0
    %208 = vmatprep.subr.mxu0 0.0
    %209 = vmatpush1.xpose.msra.mxu0 0.0
    %210 = vmatprep.subr.mxu0 0.0
    %211 = vmatpush1.xpose.msra.mxu0 0.0
    %212 = vmatprep.mubr.f32.mxu0 0.0
    %213 = vmatmul.mubr.f32.gmra.mrb[0].mxu0 %v116
    %v214 = vpop.f32.mrb[0].mxu0
    %v215 = vadd.f32 0.0, %v214
    %v216 = vpop.f32.mrb[0].mxu0
    %217 = vmatprep.mubr.f32.mxu0 0.0
    %218 = vmatmul.mubr.f32.gmra.mrb[0].mxu0 %v117
    %v219 = vpop.f32.mrb[0].mxu0
    %v220 = vadd.f32 0.0, %v219
    %v221 = vpop.f32.mrb[0].mxu0
    %222 = vmatprep.mubr.f32.mxu0 0.0
    %223 = vmatmul.mubr.f32.gmra.mrb[0].mxu0 %v118
    %v224 = vpop.f32.mrb[0].mxu0
    %v225 = vadd.f32 0.0, %v224
    %v226 = vpop.f32.mrb[0].mxu0
    %227 = vmatprep.mubr.f32.mxu0 0.0
    %228 = vmatmul.mubr.f32.gmra.mrb[0].mxu0 %v119
    %v229 = vpop.f32.mrb[0].mxu0
    %v230 = vadd.f32 0.0, %v229
    %v231 = vpop.f32.mrb[0].mxu0
    %232 = vmatprep.mubr.f32.mxu0 0.0
    %233 = vmatmul.mubr.f32.gmra.mrb[0].mxu0 %v120
    %v234 = vpop.f32.mrb[0].mxu0
    %v235 = vadd.f32 0.0, %v234
    %v236 = vpop.f32.mrb[0].mxu0
    %237 = vmatprep.mubr.f32.mxu0 0.0
    %238 = vmatmul.mubr.f32.gmra.mrb[0].mxu0 %v121
    %v239 = vpop.f32.mrb[0].mxu0
    %v240 = vadd.f32 0.0, %v239
    %v241 = vpop.f32.mrb[0].mxu0
    %242 = vmatprep.mubr.f32.mxu0 0.0
    %243 = vmatmul.mubr.f32.gmra.mrb[0].mxu0 %v122
    %v244 = vpop.f32.mrb[0].mxu0
    %v245 = vadd.f32 0.0, %v244
    %v246 = vpop.f32.mrb[0].mxu0
    %247 = vmatprep.mubr.f32.mxu0 0.0
    %248 = vmatmul.mubr.f32.gmra.mrb[0].mxu0 %v123
    %v249 = vpop.f32.mrb[0].mxu0
    %v250 = vadd.f32 0.0, %v249
    %v251 = vpop.f32.mrb[0].mxu0
    %252 = vmatprep.mubr.f32.mxu0 0.0
    %253 = vmatmul.mubr.f32.gmra.mrb[0].mxu0 %v124
    %v254 = vpop.f32.mrb[0].mxu0
    %v255 = vadd.f32 0.0, %v254
    %v256 = vpop.f32.mrb[0].mxu0
    %257 = vmatprep.mubr.f32.mxu0 0.0
    %258 = vmatmul.mubr.f32.gmra.mrb[0].mxu0 %v125
    %v259 = vpop.f32.mrb[0].mxu0
    %v260 = vadd.f32 0.0, %v259
    %v261 = vpop.f32.mrb[0].mxu0
    %262 = vmatprep.mubr.f32.mxu0 0.0
    %263 = vmatmul.mubr.f32.gmra.mrb[0].mxu0 %v126
    %v264 = vpop.f32.mrb[0].mxu0
    %v265 = vadd.f32 0.0, %v264
    %v266 = vpop.f32.mrb[0].mxu0
    %267 = vmatprep.mubr.f32.mxu0 0.0
    %268 = vmatmul.mubr.f32.gmra.mrb[0].mxu0 %v127
    %v269 = vpop.f32.mrb[0].mxu0
    %v270 = vadd.f32 0.0, %v269
    %v271 = vpop.f32.mrb[0].mxu0
    %272 = vmatprep.mubr.f32.mxu0 0.0
    %273 = vmatmul.mubr.f32.gmra.mrb[0].mxu0 %v128
    %v274 = vpop.f32.mrb[0].mxu0
    %v275 = vadd.f32 0.0, %v274
    %v276 = vpop.f32.mrb[0].mxu0
    %277 = vmatprep.mubr.f32.mxu0 0.0
    %278 = vmatmul.mubr.f32.gmra.mrb[0].mxu0 %v129
    %v279 = vpop.f32.mrb[0].mxu0
    %v280 = vadd.f32 0.0, %v279
    %v281 = vpop.f32.mrb[0].mxu0
    %282 = vmatprep.mubr.f32.mxu0 0.0
    %283 = vmatmul.mubr.f32.gmra.mrb[0].mxu0 %v130
    %v284 = vpop.f32.mrb[0].mxu0
    %v285 = vadd.f32 0.0, %v284
    %v286 = vpop.f32.mrb[0].mxu0
    %287 = vmatprep.mubr.f32.mxu0 0.0
    %288 = vmatmul.mubr.f32.gmra.mrb[0].mxu0 %v131
    %v289 = vpop.f32.mrb[0].mxu0
    %v290 = vadd.f32 0.0, %v289
    %v291 = vpop.f32.mrb[0].mxu0
    %292 = vdwg.mxu0
    %s293 = smul.u32 0, 128
    %v294 = vlaneseq
    %v295 = vshrl.u32 %v294, 7
    %v296 = vadd.s32 %v295, 8
    %v297 = vadd.s32 %v295, 16
    %v298 = vadd.s32 %v295, 24
    %v299 = vadd.s32 %v295, 32
    %v300 = vadd.s32 %v295, 40
    %v301 = vadd.s32 %v295, 48
    %v302 = vadd.s32 %v295, 56
    %v303 = vadd.s32 %v295, 64
    %v304 = vadd.s32 %v295, 72
    %v305 = vadd.s32 %v295, 80
    %v306 = vadd.s32 %v295, 88
    %v307 = vadd.s32 %v295, 96
    %v308 = vadd.s32 %v295, 104
    %v309 = vadd.s32 %v295, 112
    %v310 = vadd.s32 %v295, 120
    %v311 = vstv %s293
    %v312 = vadd.s32 %v311, %v295
    %v313 = vadd.s32 %v311, %v296
    %v314 = vadd.s32 %v311, %v297
    %v315 = vadd.s32 %v311, %v298
    %v316 = vadd.s32 %v311, %v299
    %v317 = vadd.s32 %v311, %v300
    %v318 = vadd.s32 %v311, %v301
    %v319 = vadd.s32 %v311, %v302
    %v320 = vadd.s32 %v311, %v303
    %v321 = vadd.s32 %v311, %v304
    %v322 = vadd.s32 %v311, %v305
    %v323 = vadd.s32 %v311, %v306
    %v324 = vadd.s32 %v311, %v307
    %v325 = vadd.s32 %v311, %v308
    %v326 = vadd.s32 %v311, %v309
    %v327 = vadd.s32 %v311, %v310
    %s328 = smul.u32 0, 128
    %v329 = vlaneseq
    %v330 = vand.u32 %v329, 127
    %v331 = vstv %s328
    %v332 = vadd.s32 %v331, %v330
    %vm333 = vcmp.lt.s32.totalorder %v332, 16
    %vm334 = vcmp.ne.s32.totalorder %v312, %v332
    %vm335 = vcmp.ne.s32.totalorder %v313, %v332
    %vm336 = vcmp.ne.s32.totalorder %v314, %v332
    %vm337 = vcmp.ne.s32.totalorder %v315, %v332
    %vm338 = vcmp.ne.s32.totalorder %v316, %v332
    %vm339 = vcmp.ne.s32.totalorder %v317, %v332
    %vm340 = vcmp.ne.s32.totalorder %v318, %v332
    %vm341 = vcmp.ne.s32.totalorder %v319, %v332
    %vm342 = vcmp.ne.s32.totalorder %v320, %v332
    %vm343 = vcmp.ne.s32.totalorder %v321, %v332
    %vm344 = vcmp.ne.s32.totalorder %v322, %v332
    %vm345 = vcmp.ne.s32.totalorder %v323, %v332
    %vm346 = vcmp.ne.s32.totalorder %v324, %v332
    %vm347 = vcmp.ne.s32.totalorder %v325, %v332
    %vm348 = vcmp.ne.s32.totalorder %v326, %v332
    %vm349 = vcmp.ne.s32.totalorder %v327, %v332
    %v350 = vsel %vm333, 1, 0
    %vm351 = vcmp.eq.s32.totalorder %v350, 1
    %vm352 = vmand %vm334, %vm351
    %vm353 = vmand %vm335, %vm351
    %vm354 = vmand %vm336, %vm351
    %vm355 = vmand %vm337, %vm351
    %vm356 = vmand %vm338, %vm351
    %vm357 = vmand %vm339, %vm351
    %vm358 = vmand %vm340, %vm351
    %vm359 = vmand %vm341, %vm351
    %vm360 = vmand %vm342, %vm351
    %vm361 = vmand %vm343, %vm351
    %vm362 = vmand %vm344, %vm351
    %vm363 = vmand %vm345, %vm351
    %vm364 = vmand %vm346, %vm351
    %vm365 = vmand %vm347, %vm351
    %vm366 = vmand %vm348, %vm351
    %vm367 = vmand %vm349, %vm351
    %v368 = vsel %vm352, 1, 0
    %v369 = vsel %vm353, 1, 0
    %v370 = vsel %vm354, 1, 0
    %v371 = vsel %vm355, 1, 0
    %v372 = vsel %vm356, 1, 0
    %v373 = vsel %vm357, 1, 0
    %v374 = vsel %vm358, 1, 0
    %v375 = vsel %vm359, 1, 0
    %v376 = vsel %vm360, 1, 0
    %v377 = vsel %vm361, 1, 0
    %v378 = vsel %vm362, 1, 0
    %v379 = vsel %vm363, 1, 0
    %v380 = vsel %vm364, 1, 0
    %v381 = vsel %vm365, 1, 0
    %v382 = vsel %vm366, 1, 0
    %v383 = vsel %vm367, 1, 0
    %v384 = vcvt.s32.f32 %v368
    %v385 = vcvt.s32.f32 %v369
    %v386 = vcvt.s32.f32 %v370
    %v387 = vcvt.s32.f32 %v371
    %v388 = vcvt.s32.f32 %v372
    %v389 = vcvt.s32.f32 %v373
    %v390 = vcvt.s32.f32 %v374
    %v391 = vcvt.s32.f32 %v375
    %v392 = vcvt.s32.f32 %v376
    %v393 = vcvt.s32.f32 %v377
    %v394 = vcvt.s32.f32 %v378
    %v395 = vcvt.s32.f32 %v379
    %v396 = vcvt.s32.f32 %v380
    %v397 = vcvt.s32.f32 %v381
    %v398 = vcvt.s32.f32 %v382
    %v399 = vcvt.s32.f32 %v383
    %v400 = vld [vmem:[%s0] sm:$0xff]
    %v401 = vld [vmem:[%s0 + $0x8] sm:$0xff]
    %v402 = vld [vmem:[%s0 + $0x10] sm:$0xff]
    %v403 = vld [vmem:[%s0 + $0x18] sm:$0xff]
    %v404 = vld [vmem:[%s0 + $0x20] sm:$0xff]
    %v405 = vld [vmem:[%s0 + $0x28] sm:$0xff]
    %v406 = vld [vmem:[%s0 + $0x30] sm:$0xff]
    %v407 = vld [vmem:[%s0 + $0x38] sm:$0xff]
    %v408 = vld [vmem:[%s0 + $0x40] sm:$0xff]
    %v409 = vld [vmem:[%s0 + $0x48] sm:$0xff]
    %v410 = vld [vmem:[%s0 + $0x50] sm:$0xff]
    %v411 = vld [vmem:[%s0 + $0x58] sm:$0xff]
    %v412 = vld [vmem:[%s0 + $0x60] sm:$0xff]
    %v413 = vld [vmem:[%s0 + $0x68] sm:$0xff]
    %v414 = vld [vmem:[%s0 + $0x70] sm:$0xff]
    %v415 = vld [vmem:[%s0 + $0x78] sm:$0xff]
    %v416 = vld [vmem:[%s1] sm:$0x1]
    %417 = vset.pattern.permute.xlu0 0
    %418 = vperm.xlu0 %417, %v400
    %v419 = vpop.permute.xlu0 %418
    %420 = vset.pattern.permute.xlu0 0
    %421 = vperm.xlu0 %420, %v401
    %v422 = vpop.permute.xlu0 %421
    %423 = vset.pattern.permute.xlu0 0
    %424 = vperm.xlu0 %423, %v402
    %v425 = vpop.permute.xlu0 %424
    %426 = vset.pattern.permute.xlu0 0
    %427 = vperm.xlu0 %426, %v403
    %v428 = vpop.permute.xlu0 %427
    %429 = vset.pattern.permute.xlu0 0
    %430 = vperm.xlu0 %429, %v404
    %v431 = vpop.permute.xlu0 %430
    %432 = vset.pattern.permute.xlu0 0
    %433 = vperm.xlu0 %432, %v405
    %v434 = vpop.permute.xlu0 %433
    %435 = vset.pattern.permute.xlu0 0
    %436 = vperm.xlu0 %435, %v406
    %v437 = vpop.permute.xlu0 %436
    %438 = vset.pattern.permute.xlu0 0
    %439 = vperm.xlu0 %438, %v407
    %v440 = vpop.permute.xlu0 %439
    %441 = vset.pattern.permute.xlu0 0
    %442 = vperm.xlu0 %441, %v408
    %v443 = vpop.permute.xlu0 %442
    %444 = vset.pattern.permute.xlu0 0
    %445 = vperm.xlu0 %444, %v409
    %v446 = vpop.permute.xlu0 %445
    %447 = vset.pattern.permute.xlu0 0
    %448 = vperm.xlu0 %447, %v410
    %v449 = vpop.permute.xlu0 %448
    %450 = vset.pattern.permute.xlu0 0
    %451 = vperm.xlu0 %450, %v411
    %v452 = vpop.permute.xlu0 %451
    %453 = vset.pattern.permute.xlu0 0
    %454 = vperm.xlu0 %453, %v412
    %v455 = vpop.permute.xlu0 %454
    %456 = vset.pattern.permute.xlu0 0
    %457 = vperm.xlu0 %456, %v413
    %v458 = vpop.permute.xlu0 %457
    %459 = vset.pattern.permute.xlu0 0
    %460 = vperm.xlu0 %459, %v414
    %v461 = vpop.permute.xlu0 %460
    %462 = vset.pattern.permute.xlu0 0
    %463 = vperm.xlu0 %462, %v415
    %v464 = vpop.permute.xlu0 %463
    %v465 = vlaneseq
    %v466 = vshrl.u32 %v465, 7
    %v467 = vsub.s32 0, %v466
    %v468 = vrot.slane %v416, %v467
    %vm469 = vcmp.eq.s32.totalorder %v419, %v468
    %vm470 = vcmp.eq.s32.totalorder %v422, %v468
    %vm471 = vcmp.eq.s32.totalorder %v425, %v468
    %vm472 = vcmp.eq.s32.totalorder %v428, %v468
    %vm473 = vcmp.eq.s32.totalorder %v431, %v468
    %vm474 = vcmp.eq.s32.totalorder %v434, %v468
    %vm475 = vcmp.eq.s32.totalorder %v437, %v468
    %vm476 = vcmp.eq.s32.totalorder %v440, %v468
    %vm477 = vcmp.eq.s32.totalorder %v443, %v468
    %vm478 = vcmp.eq.s32.totalorder %v446, %v468
    %vm479 = vcmp.eq.s32.totalorder %v449, %v468
    %vm480 = vcmp.eq.s32.totalorder %v452, %v468
    %vm481 = vcmp.eq.s32.totalorder %v455, %v468
    %vm482 = vcmp.eq.s32.totalorder %v458, %v468
    %vm483 = vcmp.eq.s32.totalorder %v461, %v468
    %vm484 = vcmp.eq.s32.totalorder %v464, %v468
    %vm485 = vmand %vm469, %vm352
    %vm486 = vmand %vm470, %vm353
    %vm487 = vmand %vm471, %vm354
    %vm488 = vmand %vm472, %vm355
    %vm489 = vmand %vm473, %vm356
    %vm490 = vmand %vm474, %vm357
    %vm491 = vmand %vm475, %vm358
    %vm492 = vmand %vm476, %vm359
    %vm493 = vmand %vm477, %vm360
    %vm494 = vmand %vm478, %vm361
    %vm495 = vmand %vm479, %vm362
    %vm496 = vmand %vm480, %vm363
    %vm497 = vmand %vm481, %vm364
    %vm498 = vmand %vm482, %vm365
    %vm499 = vmand %vm483, %vm366
    %vm500 = vmand %vm484, %vm367
    %v501 = vsel %vm485, 1, 0
    %v502 = vsel %vm486, 1, 0
    %v503 = vsel %vm487, 1, 0
    %v504 = vsel %vm488, 1, 0
    %v505 = vsel %vm489, 1, 0
    %v506 = vsel %vm490, 1, 0
    %v507 = vsel %vm491, 1, 0
    %v508 = vsel %vm492, 1, 0
    %v509 = vsel %vm493, 1, 0
    %v510 = vsel %vm494, 1, 0
    %v511 = vsel %vm495, 1, 0
    %v512 = vsel %vm496, 1, 0
    %v513 = vsel %vm497, 1, 0
    %v514 = vsel %vm498, 1, 0
    %v515 = vsel %vm499, 1, 0
    %v516 = vsel %vm500, 1, 0
    %v517 = vcvt.s32.f32 %v501
    %v518 = vcvt.s32.f32 %v502
    %v519 = vcvt.s32.f32 %v503
    %v520 = vcvt.s32.f32 %v504
    %v521 = vcvt.s32.f32 %v505
    %v522 = vcvt.s32.f32 %v506
    %v523 = vcvt.s32.f32 %v507
    %v524 = vcvt.s32.f32 %v508
    %v525 = vcvt.s32.f32 %v509
    %v526 = vcvt.s32.f32 %v510
    %v527 = vcvt.s32.f32 %v511
    %v528 = vcvt.s32.f32 %v512
    %v529 = vcvt.s32.f32 %v513
    %v530 = vcvt.s32.f32 %v514
    %v531 = vcvt.s32.f32 %v515
    %v532 = vcvt.s32.f32 %v516
    %533 = vmax.xlane.f32.xlu0 %v215
    %v534 = vpop.xlane.xlu0 %533
    %535 = vmax.xlane.f32.xlu0 %v220
    %v536 = vpop.xlane.xlu0 %535
    %537 = vmax.xlane.f32.xlu0 %v225
    %v538 = vpop.xlane.xlu0 %537
    %539 = vmax.xlane.f32.xlu0 %v230
    %v540 = vpop.xlane.xlu0 %539
    %541 = vmax.xlane.f32.xlu0 %v235
    %v542 = vpop.xlane.xlu0 %541
    %543 = vmax.xlane.f32.xlu0 %v240
    %v544 = vpop.xlane.xlu0 %543
    %545 = vmax.xlane.f32.xlu0 %v245
    %v546 = vpop.xlane.xlu0 %545
    %547 = vmax.xlane.f32.xlu0 %v250
    %v548 = vpop.xlane.xlu0 %547
    %549 = vmax.xlane.f32.xlu0 %v255
    %v550 = vpop.xlane.xlu0 %549
    %551 = vmax.xlane.f32.xlu0 %v260
    %v552 = vpop.xlane.xlu0 %551
    %553 = vmax.xlane.f32.xlu0 %v265
    %v554 = vpop.xlane.xlu0 %553
    %555 = vmax.xlane.f32.xlu0 %v270
    %v556 = vpop.xlane.xlu0 %555
    %557 = vmax.xlane.f32.xlu0 %v275
    %v558 = vpop.xlane.xlu0 %557
    %559 = vmax.xlane.f32.xlu0 %v280
    %v560 = vpop.xlane.xlu0 %559
    %561 = vmax.xlane.f32.xlu0 %v285
    %v562 = vpop.xlane.xlu0 %561
    %563 = vmax.xlane.f32.xlu0 %v290
    %v564 = vpop.xlane.xlu0 %563
    %v565 = vld [vmem:[#allocation2] sm:$0xff]
    %v566 = vld [vmem:[#allocation2 + $0x8] sm:$0xff]
    %v567 = vld [vmem:[#allocation2 + $0x10] sm:$0xff]
    %v568 = vld [vmem:[#allocation2 + $0x18] sm:$0xff]
    %v569 = vld [vmem:[#allocation2 + $0x20] sm:$0xff]
    %v570 = vld [vmem:[#allocation2 + $0x28] sm:$0xff]
    %v571 = vld [vmem:[#allocation2 + $0x30] sm:$0xff]
    %v572 = vld [vmem:[#allocation2 + $0x38] sm:$0xff]
    %v573 = vld [vmem:[#allocation2 + $0x40] sm:$0xff]
    %v574 = vld [vmem:[#allocation2 + $0x48] sm:$0xff]
    %v575 = vld [vmem:[#allocation2 + $0x50] sm:$0xff]
    %v576 = vld [vmem:[#allocation2 + $0x58] sm:$0xff]
    %v577 = vld [vmem:[#allocation2 + $0x60] sm:$0xff]
    %v578 = vld [vmem:[#allocation2 + $0x68] sm:$0xff]
    %v579 = vld [vmem:[#allocation2 + $0x70] sm:$0xff]
    %v580 = vld [vmem:[#allocation2 + $0x78] sm:$0xff]
    %v581 = vmax.f32 %v565, %v534
    %v582 = vmax.f32 %v566, %v536
    %v583 = vmax.f32 %v567, %v538
    %v584 = vmax.f32 %v568, %v540
    %v585 = vmax.f32 %v569, %v542
    %v586 = vmax.f32 %v570, %v544
    %v587 = vmax.f32 %v571, %v546
    %v588 = vmax.f32 %v572, %v548
    %v589 = vmax.f32 %v573, %v550
    %v590 = vmax.f32 %v574, %v552
    %v591 = vmax.f32 %v575, %v554
    %v592 = vmax.f32 %v576, %v556
    %v593 = vmax.f32 %v577, %v558
    %v594 = vmax.f32 %v578, %v560
    %v595 = vmax.f32 %v579, %v562
    %v596 = vmax.f32 %v580, %v564
    %v597 = vld [vmem:[#allocation3] sm:$0xff]
    %v598 = vld [vmem:[#allocation3 + $0x8] sm:$0xff]
    %v599 = vld [vmem:[#allocation3 + $0x10] sm:$0xff]
    %v600 = vld [vmem:[#allocation3 + $0x18] sm:$0xff]
    %v601 = vld [vmem:[#allocation3 + $0x20] sm:$0xff]
    %v602 = vld [vmem:[#allocation3 + $0x28] sm:$0xff]
    %v603 = vld [vmem:[#allocation3 + $0x30] sm:$0xff]
    %v604 = vld [vmem:[#allocation3 + $0x38] sm:$0xff]
    %v605 = vld [vmem:[#allocation3 + $0x40] sm:$0xff]
    %v606 = vld [vmem:[#allocation3 + $0x48] sm:$0xff]
    %v607 = vld [vmem:[#allocation3 + $0x50] sm:$0xff]
    %v608 = vld [vmem:[#allocation3 + $0x58] sm:$0xff]
    %v609 = vld [vmem:[#allocation3 + $0x60] sm:$0xff]
    %v610 = vld [vmem:[#allocation3 + $0x68] sm:$0xff]
    %v611 = vld [vmem:[#allocation3 + $0x70] sm:$0xff]
    %v612 = vld [vmem:[#allocation3 + $0x78] sm:$0xff]
    %v613 = vsub.f32 %v565, %v581
    %v614 = vsub.f32 %v566, %v582
    %v615 = vsub.f32 %v567, %v583
    %v616 = vsub.f32 %v568, %v584
    %v617 = vsub.f32 %v569, %v585
    %v618 = vsub.f32 %v570, %v586
    %v619 = vsub.f32 %v571, %v587
    %v620 = vsub.f32 %v572, %v588
    %v621 = vsub.f32 %v573, %v589
    %v622 = vsub.f32 %v574, %v590
    %v623 = vsub.f32 %v575, %v591
    %v624 = vsub.f32 %v576, %v592
    %v625 = vsub.f32 %v577, %v593
    %v626 = vsub.f32 %v578, %v594
    %v627 = vsub.f32 %v579, %v595
    %v628 = vsub.f32 %v580, %v596
    %v629 = vmul.f32 %v613, 1.442695
    %v630 = vpow.pop %v629
    %v631 = vmul.f32 %v614, 1.442695
    %v632 = vpow.pop %v631
    %v633 = vmul.f32 %v615, 1.442695
    %v634 = vpow.pop %v633
    %v635 = vmul.f32 %v616, 1.442695
    %v636 = vpow.pop %v635
    %v637 = vmul.f32 %v617, 1.442695
    %v638 = vpow.pop %v637
    %v639 = vmul.f32 %v618, 1.442695
    %v640 = vpow.pop %v639
    %v641 = vmul.f32 %v619, 1.442695
    %v642 = vpow.pop %v641
    %v643 = vmul.f32 %v620, 1.442695
    %v644 = vpow.pop %v643
    %v645 = vmul.f32 %v621, 1.442695
    %v646 = vpow.pop %v645
    %v647 = vmul.f32 %v622, 1.442695
    %v648 = vpow.pop %v647
    %v649 = vmul.f32 %v623, 1.442695
    %v650 = vpow.pop %v649
    %v651 = vmul.f32 %v624, 1.442695
    %v652 = vpow.pop %v651
    %v653 = vmul.f32 %v625, 1.442695
    %v654 = vpow.pop %v653
    %v655 = vmul.f32 %v626, 1.442695
    %v656 = vpow.pop %v655
    %v657 = vmul.f32 %v627, 1.442695
    %v658 = vpow.pop %v657
    %v659 = vmul.f32 %v628, 1.442695
    %v660 = vpow.pop %v659
    %v661 = vmul.f32 %v597, %v630
    %v662 = vmul.f32 %v598, %v632
    %v663 = vmul.f32 %v599, %v634
    %v664 = vmul.f32 %v600, %v636
    %v665 = vmul.f32 %v601, %v638
    %v666 = vmul.f32 %v602, %v640
    %v667 = vmul.f32 %v603, %v642
    %v668 = vmul.f32 %v604, %v644
    %v669 = vmul.f32 %v605, %v646
    %v670 = vmul.f32 %v606, %v648
    %v671 = vmul.f32 %v607, %v650
    %v672 = vmul.f32 %v608, %v652
    %v673 = vmul.f32 %v609, %v654
    %v674 = vmul.f32 %v610, %v656
    %v675 = vmul.f32 %v611, %v658
    %v676 = vmul.f32 %v612, %v660
    %678 = vset.pattern.permute.xlu0 0
    %679 = vperm.xlu0 %678, %v581
    %v680 = vpop.permute.xlu0 %679
    %683 = vset.pattern.permute.xlu0 0
    %684 = vperm.xlu0 %683, %v582
    %v685 = vpop.permute.xlu0 %684
    %688 = vset.pattern.permute.xlu0 0
    %689 = vperm.xlu0 %688, %v583
    %v690 = vpop.permute.xlu0 %689
    %693 = vset.pattern.permute.xlu0 0
    %694 = vperm.xlu0 %693, %v584
    %v695 = vpop.permute.xlu0 %694
    %698 = vset.pattern.permute.xlu0 0
    %699 = vperm.xlu0 %698, %v585
    %v700 = vpop.permute.xlu0 %699
    %703 = vset.pattern.permute.xlu0 0
    %704 = vperm.xlu0 %703, %v586
    %v705 = vpop.permute.xlu0 %704
    %708 = vset.pattern.permute.xlu0 0
    %709 = vperm.xlu0 %708, %v587
    %v710 = vpop.permute.xlu0 %709
    %713 = vset.pattern.permute.xlu0 0
    %714 = vperm.xlu0 %713, %v588
    %v715 = vpop.permute.xlu0 %714
    %718 = vset.pattern.permute.xlu0 0
    %719 = vperm.xlu0 %718, %v589
    %v720 = vpop.permute.xlu0 %719
    %723 = vset.pattern.permute.xlu0 0
    %724 = vperm.xlu0 %723, %v590
    %v725 = vpop.permute.xlu0 %724
    %728 = vset.pattern.permute.xlu0 0
    %729 = vperm.xlu0 %728, %v591
    %v730 = vpop.permute.xlu0 %729
    %733 = vset.pattern.permute.xlu0 0
    %734 = vperm.xlu0 %733, %v592
    %v735 = vpop.permute.xlu0 %734
    %738 = vset.pattern.permute.xlu0 0
    %739 = vperm.xlu0 %738, %v593
    %v740 = vpop.permute.xlu0 %739
    %743 = vset.pattern.permute.xlu0 0
    %744 = vperm.xlu0 %743, %v594
    %v745 = vpop.permute.xlu0 %744
    %748 = vset.pattern.permute.xlu0 0
    %749 = vperm.xlu0 %748, %v595
    %v750 = vpop.permute.xlu0 %749
    %753 = vset.pattern.permute.xlu0 0
    %754 = vperm.xlu0 %753, %v596
    %v755 = vpop.permute.xlu0 %754
    %v757 = vsub.f32 %v215, %v680
    %v758 = vsub.f32 %v220, %v685
    %v759 = vsub.f32 %v225, %v690
    %v760 = vsub.f32 %v230, %v695
    %v761 = vsub.f32 %v235, %v700
    %v762 = vsub.f32 %v240, %v705
    %v763 = vsub.f32 %v245, %v710
    %v764 = vsub.f32 %v250, %v715
    %v765 = vsub.f32 %v255, %v720
    %v766 = vsub.f32 %v260, %v725
    %v767 = vsub.f32 %v265, %v730
    %v768 = vsub.f32 %v270, %v735
    %v769 = vsub.f32 %v275, %v740
    %v770 = vsub.f32 %v280, %v745
    %v771 = vsub.f32 %v285, %v750
    %v772 = vsub.f32 %v290, %v755
    %v773 = vmul.f32 %v757, 1.442695
    %v774 = vpow.pop %v773
    %v775 = vmul.f32 %v758, 1.442695
    %v776 = vpow.pop %v775
    %v777 = vmul.f32 %v759, 1.442695
    %v778 = vpow.pop %v777
    %v779 = vmul.f32 %v760, 1.442695
    %v780 = vpow.pop %v779
    %v781 = vmul.f32 %v761, 1.442695
    %v782 = vpow.pop %v781
    %v783 = vmul.f32 %v762, 1.442695
    %v784 = vpow.pop %v783
    %v785 = vmul.f32 %v763, 1.442695
    %v786 = vpow.pop %v785
    %v787 = vmul.f32 %v764, 1.442695
    %v788 = vpow.pop %v787
    %v789 = vmul.f32 %v765, 1.442695
    %v790 = vpow.pop %v789
    %v791 = vmul.f32 %v766, 1.442695
    %v792 = vpow.pop %v791
    %v793 = vmul.f32 %v767, 1.442695
    %v794 = vpow.pop %v793
    %v795 = vmul.f32 %v768, 1.442695
    %v796 = vpow.pop %v795
    %v797 = vmul.f32 %v769, 1.442695
    %v798 = vpow.pop %v797
    %v799 = vmul.f32 %v770, 1.442695
    %v800 = vpow.pop %v799
    %v801 = vmul.f32 %v771, 1.442695
    %v802 = vpow.pop %v801
    %v803 = vmul.f32 %v772, 1.442695
    %v804 = vpow.pop %v803
    %v805 = vmul.f32 %v774, %v384
    %v806 = vmul.f32 %v776, %v385
    %v807 = vmul.f32 %v778, %v386
    %v808 = vmul.f32 %v780, %v387
    %v809 = vmul.f32 %v782, %v388
    %v810 = vmul.f32 %v784, %v389
    %v811 = vmul.f32 %v786, %v390
    %v812 = vmul.f32 %v788, %v391
    %v813 = vmul.f32 %v790, %v392
    %v814 = vmul.f32 %v792, %v393
    %v815 = vmul.f32 %v794, %v394
    %v816 = vmul.f32 %v796, %v395
    %v817 = vmul.f32 %v798, %v396
    %v818 = vmul.f32 %v800, %v397
    %v819 = vmul.f32 %v802, %v398
    %v820 = vmul.f32 %v804, %v399
    %821 = vadd.xlane.f32.xlu0 %v805
    %v822 = vpop.xlane.xlu0 %821
    %823 = vadd.xlane.f32.xlu0 %v806
    %v824 = vpop.xlane.xlu0 %823
    %825 = vadd.xlane.f32.xlu0 %v807
    %v826 = vpop.xlane.xlu0 %825
    %827 = vadd.xlane.f32.xlu0 %v808
    %v828 = vpop.xlane.xlu0 %827
    %829 = vadd.xlane.f32.xlu0 %v809
    %v830 = vpop.xlane.xlu0 %829
    %831 = vadd.xlane.f32.xlu0 %v810
    %v832 = vpop.xlane.xlu0 %831
    %833 = vadd.xlane.f32.xlu0 %v811
    %v834 = vpop.xlane.xlu0 %833
    %835 = vadd.xlane.f32.xlu0 %v812
    %v836 = vpop.xlane.xlu0 %835
    %837 = vadd.xlane.f32.xlu0 %v813
    %v838 = vpop.xlane.xlu0 %837
    %839 = vadd.xlane.f32.xlu0 %v814
    %v840 = vpop.xlane.xlu0 %839
    %841 = vadd.xlane.f32.xlu0 %v815
    %v842 = vpop.xlane.xlu0 %841
    %843 = vadd.xlane.f32.xlu0 %v816
    %v844 = vpop.xlane.xlu0 %843
    %845 = vadd.xlane.f32.xlu0 %v817
    %v846 = vpop.xlane.xlu0 %845
    %847 = vadd.xlane.f32.xlu0 %v818
    %v848 = vpop.xlane.xlu0 %847
    %849 = vadd.xlane.f32.xlu0 %v819
    %v850 = vpop.xlane.xlu0 %849
    %851 = vadd.xlane.f32.xlu0 %v820
    %v852 = vpop.xlane.xlu0 %851
    %v853 = vadd.f32 %v661, %v822
    %v854 = vadd.f32 %v662, %v824
    %v855 = vadd.f32 %v663, %v826
    %v856 = vadd.f32 %v664, %v828
    %v857 = vadd.f32 %v665, %v830
    %v858 = vadd.f32 %v666, %v832
    %v859 = vadd.f32 %v667, %v834
    %v860 = vadd.f32 %v668, %v836
    %v861 = vadd.f32 %v669, %v838
    %v862 = vadd.f32 %v670, %v840
    %v863 = vadd.f32 %v671, %v842
    %v864 = vadd.f32 %v672, %v844
    %v865 = vadd.f32 %v673, %v846
    %v866 = vadd.f32 %v674, %v848
    %v867 = vadd.f32 %v675, %v850
    %v868 = vadd.f32 %v676, %v852
    %vm869 = vcmask 7168
    %870 = vst.msk [vmem:[#allocation3] sm:$0xff] %vm869, %v853
    %871 = vst.msk [vmem:[#allocation3 + $0x8] sm:$0xff] %vm869, %v854
    %872 = vst.msk [vmem:[#allocation3 + $0x10] sm:$0xff] %vm869, %v855
    %873 = vst.msk [vmem:[#allocation3 + $0x18] sm:$0xff] %vm869, %v856
    %874 = vst.msk [vmem:[#allocation3 + $0x20] sm:$0xff] %vm869, %v857
    %875 = vst.msk [vmem:[#allocation3 + $0x28] sm:$0xff] %vm869, %v858
    %876 = vst.msk [vmem:[#allocation3 + $0x30] sm:$0xff] %vm869, %v859
    %877 = vst.msk [vmem:[#allocation3 + $0x38] sm:$0xff] %vm869, %v860
    %878 = vst.msk [vmem:[#allocation3 + $0x40] sm:$0xff] %vm869, %v861
    %879 = vst.msk [vmem:[#allocation3 + $0x48] sm:$0xff] %vm869, %v862
    %880 = vst.msk [vmem:[#allocation3 + $0x50] sm:$0xff] %vm869, %v863
    %881 = vst.msk [vmem:[#allocation3 + $0x58] sm:$0xff] %vm869, %v864
    %882 = vst.msk [vmem:[#allocation3 + $0x60] sm:$0xff] %vm869, %v865
    %883 = vst.msk [vmem:[#allocation3 + $0x68] sm:$0xff] %vm869, %v866
    %884 = vst.msk [vmem:[#allocation3 + $0x70] sm:$0xff] %vm869, %v867
    %885 = vst.msk [vmem:[#allocation3 + $0x78] sm:$0xff] %vm869, %v868
    %886 = vst.msk [vmem:[#allocation2] sm:$0xff] %vm869, %v581
    %887 = vst.msk [vmem:[#allocation2 + $0x8] sm:$0xff] %vm869, %v582
    %888 = vst.msk [vmem:[#allocation2 + $0x10] sm:$0xff] %vm869, %v583
    %889 = vst.msk [vmem:[#allocation2 + $0x18] sm:$0xff] %vm869, %v584
    %890 = vst.msk [vmem:[#allocation2 + $0x20] sm:$0xff] %vm869, %v585
    %891 = vst.msk [vmem:[#allocation2 + $0x28] sm:$0xff] %vm869, %v586
    %892 = vst.msk [vmem:[#allocation2 + $0x30] sm:$0xff] %vm869, %v587
    %893 = vst.msk [vmem:[#allocation2 + $0x38] sm:$0xff] %vm869, %v588
    %894 = vst.msk [vmem:[#allocation2 + $0x40] sm:$0xff] %vm869, %v589
    %895 = vst.msk [vmem:[#allocation2 + $0x48] sm:$0xff] %vm869, %v590
    %896 = vst.msk [vmem:[#allocation2 + $0x50] sm:$0xff] %vm869, %v591
    %897 = vst.msk [vmem:[#allocation2 + $0x58] sm:$0xff] %vm869, %v592
    %898 = vst.msk [vmem:[#allocation2 + $0x60] sm:$0xff] %vm869, %v593
    %899 = vst.msk [vmem:[#allocation2 + $0x68] sm:$0xff] %vm869, %v594
    %900 = vst.msk [vmem:[#allocation2 + $0x70] sm:$0xff] %vm869, %v595
    %901 = vst.msk [vmem:[#allocation2 + $0x78] sm:$0xff] %vm869, %v596
    %v902 = vld [vmem:[#allocation4] sm:$0xff]
    %v903 = vld [vmem:[#allocation4 + $0x8] sm:$0xff]
    %v904 = vld [vmem:[#allocation4 + $0x10] sm:$0xff]
    %v905 = vld [vmem:[#allocation4 + $0x18] sm:$0xff]
    %v906 = vld [vmem:[#allocation4 + $0x20] sm:$0xff]
    %v907 = vld [vmem:[#allocation4 + $0x28] sm:$0xff]
    %v908 = vld [vmem:[#allocation4 + $0x30] sm:$0xff]
    %v909 = vld [vmem:[#allocation4 + $0x38] sm:$0xff]
    %v910 = vld [vmem:[#allocation4 + $0x40] sm:$0xff]
    %v911 = vld [vmem:[#allocation4 + $0x48] sm:$0xff]
    %v912 = vld [vmem:[#allocation4 + $0x50] sm:$0xff]
    %v913 = vld [vmem:[#allocation4 + $0x58] sm:$0xff]
    %v914 = vld [vmem:[#allocation4 + $0x60] sm:$0xff]
    %v915 = vld [vmem:[#allocation4 + $0x68] sm:$0xff]
    %v916 = vld [vmem:[#allocation4 + $0x70] sm:$0xff]
    %v917 = vld [vmem:[#allocation4 + $0x78] sm:$0xff]
    %v918 = vmul.f32 %v517, %v215
    %v919 = vmul.f32 %v518, %v220
    %v920 = vmul.f32 %v519, %v225
    %v921 = vmul.f32 %v520, %v230
    %v922 = vmul.f32 %v521, %v235
    %v923 = vmul.f32 %v522, %v240
    %v924 = vmul.f32 %v523, %v245
    %v925 = vmul.f32 %v524, %v250
    %v926 = vmul.f32 %v525, %v255
    %v927 = vmul.f32 %v526, %v260
    %v928 = vmul.f32 %v527, %v265
    %v929 = vmul.f32 %v528, %v270
    %v930 = vmul.f32 %v529, %v275
    %v931 = vmul.f32 %v530, %v280
    %v932 = vmul.f32 %v531, %v285
    %v933 = vmul.f32 %v532, %v290
    %934 = vadd.xlane.f32.xlu0 %v918
    %v935 = vpop.xlane.xlu0 %934
    %936 = vadd.xlane.f32.xlu0 %v919
    %v937 = vpop.xlane.xlu0 %936
    %938 = vadd.xlane.f32.xlu0 %v920
    %v939 = vpop.xlane.xlu0 %938
    %940 = vadd.xlane.f32.xlu0 %v921
    %v941 = vpop.xlane.xlu0 %940
    %942 = vadd.xlane.f32.xlu0 %v922
    %v943 = vpop.xlane.xlu0 %942
    %944 = vadd.xlane.f32.xlu0 %v923
    %v945 = vpop.xlane.xlu0 %944
    %946 = vadd.xlane.f32.xlu0 %v924
    %v947 = vpop.xlane.xlu0 %946
    %948 = vadd.xlane.f32.xlu0 %v925
    %v949 = vpop.xlane.xlu0 %948
    %950 = vadd.xlane.f32.xlu0 %v926
    %v951 = vpop.xlane.xlu0 %950
    %952 = vadd.xlane.f32.xlu0 %v927
    %v953 = vpop.xlane.xlu0 %952
    %954 = vadd.xlane.f32.xlu0 %v928
    %v955 = vpop.xlane.xlu0 %954
    %956 = vadd.xlane.f32.xlu0 %v929
    %v957 = vpop.xlane.xlu0 %956
    %958 = vadd.xlane.f32.xlu0 %v930
    %v959 = vpop.xlane.xlu0 %958
    %960 = vadd.xlane.f32.xlu0 %v931
    %v961 = vpop.xlane.xlu0 %960
    %962 = vadd.xlane.f32.xlu0 %v932
    %v963 = vpop.xlane.xlu0 %962
    %964 = vadd.xlane.f32.xlu0 %v933
    %v965 = vpop.xlane.xlu0 %964
    %v966 = vadd.f32 %v902, %v935
    %v967 = vadd.f32 %v903, %v937
    %v968 = vadd.f32 %v904, %v939
    %v969 = vadd.f32 %v905, %v941
    %v970 = vadd.f32 %v906, %v943
    %v971 = vadd.f32 %v907, %v945
    %v972 = vadd.f32 %v908, %v947
    %v973 = vadd.f32 %v909, %v949
    %v974 = vadd.f32 %v910, %v951
    %v975 = vadd.f32 %v911, %v953
    %v976 = vadd.f32 %v912, %v955
    %v977 = vadd.f32 %v913, %v957
    %v978 = vadd.f32 %v914, %v959
    %v979 = vadd.f32 %v915, %v961
    %v980 = vadd.f32 %v916, %v963
    %v981 = vadd.f32 %v917, %v965
    %982 = vst.msk [vmem:[#allocation4] sm:$0xff] %vm869, %v966
    %983 = vst.msk [vmem:[#allocation4 + $0x8] sm:$0xff] %vm869, %v967
    %984 = vst.msk [vmem:[#allocation4 + $0x10] sm:$0xff] %vm869, %v968
    %985 = vst.msk [vmem:[#allocation4 + $0x18] sm:$0xff] %vm869, %v969
    %986 = vst.msk [vmem:[#allocation4 + $0x20] sm:$0xff] %vm869, %v970
    %987 = vst.msk [vmem:[#allocation4 + $0x28] sm:$0xff] %vm869, %v971
    %988 = vst.msk [vmem:[#allocation4 + $0x30] sm:$0xff] %vm869, %v972
    %989 = vst.msk [vmem:[#allocation4 + $0x38] sm:$0xff] %vm869, %v973
    %990 = vst.msk [vmem:[#allocation4 + $0x40] sm:$0xff] %vm869, %v974
    %991 = vst.msk [vmem:[#allocation4 + $0x48] sm:$0xff] %vm869, %v975
    %992 = vst.msk [vmem:[#allocation4 + $0x50] sm:$0xff] %vm869, %v976
    %993 = vst.msk [vmem:[#allocation4 + $0x58] sm:$0xff] %vm869, %v977
    %994 = vst.msk [vmem:[#allocation4 + $0x60] sm:$0xff] %vm869, %v978
    %995 = vst.msk [vmem:[#allocation4 + $0x68] sm:$0xff] %vm869, %v979
    %996 = vst.msk [vmem:[#allocation4 + $0x70] sm:$0xff] %vm869, %v980
    %997 = vst.msk [vmem:[#allocation4 + $0x78] sm:$0xff] %vm869, %v981
    %v998 = vld [vmem:[#allocation5] sm:$0xff]
    %v999 = vld [vmem:[#allocation5 + $0x8] sm:$0xff]
    %v1000 = vld [vmem:[#allocation5 + $0x10] sm:$0xff]
    %v1001 = vld [vmem:[#allocation5 + $0x18] sm:$0xff]
    %v1002 = vld [vmem:[#allocation5 + $0x20] sm:$0xff]
    %v1003 = vld [vmem:[#allocation5 + $0x28] sm:$0xff]
    %v1004 = vld [vmem:[#allocation5 + $0x30] sm:$0xff]
    %v1005 = vld [vmem:[#allocation5 + $0x38] sm:$0xff]
    %v1006 = vld [vmem:[#allocation5 + $0x40] sm:$0xff]
    %v1007 = vld [vmem:[#allocation5 + $0x48] sm:$0xff]
    %v1008 = vld [vmem:[#allocation5 + $0x50] sm:$0xff]
    %v1009 = vld [vmem:[#allocation5 + $0x58] sm:$0xff]
    %v1010 = vld [vmem:[#allocation5 + $0x60] sm:$0xff]
    %v1011 = vld [vmem:[#allocation5 + $0x68] sm:$0xff]
    %v1012 = vld [vmem:[#allocation5 + $0x70] sm:$0xff]
    %v1013 = vld [vmem:[#allocation5 + $0x78] sm:$0xff]
    %1014 = vadd.xlane.f32.xlu0 %v517
    %v1015 = vpop.xlane.xlu0 %1014
    %1016 = vadd.xlane.f32.xlu0 %v518
    %v1017 = vpop.xlane.xlu0 %1016
    %1018 = vadd.xlane.f32.xlu0 %v519
    %v1019 = vpop.xlane.xlu0 %1018
    %1020 = vadd.xlane.f32.xlu0 %v520
    %v1021 = vpop.xlane.xlu0 %1020
    %1022 = vadd.xlane.f32.xlu0 %v521
    %v1023 = vpop.xlane.xlu0 %1022
    %1024 = vadd.xlane.f32.xlu0 %v522
    %v1025 = vpop.xlane.xlu0 %1024
    %1026 = vadd.xlane.f32.xlu0 %v523
    %v1027 = vpop.xlane.xlu0 %1026
    %1028 = vadd.xlane.f32.xlu0 %v524
    %v1029 = vpop.xlane.xlu0 %1028
    %1030 = vadd.xlane.f32.xlu0 %v525
    %v1031 = vpop.xlane.xlu0 %1030
    %1032 = vadd.xlane.f32.xlu0 %v526
    %v1033 = vpop.xlane.xlu0 %1032
    %1034 = vadd.xlane.f32.xlu0 %v527
    %v1035 = vpop.xlane.xlu0 %1034
    %1036 = vadd.xlane.f32.xlu0 %v528
    %v1037 = vpop.xlane.xlu0 %1036
    %1038 = vadd.xlane.f32.xlu0 %v529
    %v1039 = vpop.xlane.xlu0 %1038
    %1040 = vadd.xlane.f32.xlu0 %v530
    %v1041 = vpop.xlane.xlu0 %1040
    %1042 = vadd.xlane.f32.xlu0 %v531
    %v1043 = vpop.xlane.xlu0 %1042
    %1044 = vadd.xlane.f32.xlu0 %v532
    %v1045 = vpop.xlane.xlu0 %1044
    %v1046 = vadd.f32 %v998, %v1015
    %v1047 = vadd.f32 %v999, %v1017
    %v1048 = vadd.f32 %v1000, %v1019
    %v1049 = vadd.f32 %v1001, %v1021
    %v1050 = vadd.f32 %v1002, %v1023
    %v1051 = vadd.f32 %v1003, %v1025
    %v1052 = vadd.f32 %v1004, %v1027
    %v1053 = vadd.f32 %v1005, %v1029
    %v1054 = vadd.f32 %v1006, %v1031
    %v1055 = vadd.f32 %v1007, %v1033
    %v1056 = vadd.f32 %v1008, %v1035
    %v1057 = vadd.f32 %v1009, %v1037
    %v1058 = vadd.f32 %v1010, %v1039
    %v1059 = vadd.f32 %v1011, %v1041
    %v1060 = vadd.f32 %v1012, %v1043
    %v1061 = vadd.f32 %v1013, %v1045
    %1062 = vst.msk [vmem:[#allocation5] sm:$0xff] %vm869, %v1046
    %1063 = vst.msk [vmem:[#allocation5 + $0x8] sm:$0xff] %vm869, %v1047
    %1064 = vst.msk [vmem:[#allocation5 + $0x10] sm:$0xff] %vm869, %v1048
    %1065 = vst.msk [vmem:[#allocation5 + $0x18] sm:$0xff] %vm869, %v1049
    %1066 = vst.msk [vmem:[#allocation5 + $0x20] sm:$0xff] %vm869, %v1050
    %1067 = vst.msk [vmem:[#allocation5 + $0x28] sm:$0xff] %vm869, %v1051
    %1068 = vst.msk [vmem:[#allocation5 + $0x30] sm:$0xff] %vm869, %v1052
    %1069 = vst.msk [vmem:[#allocation5 + $0x38] sm:$0xff] %vm869, %v1053
    %1070 = vst.msk [vmem:[#allocation5 + $0x40] sm:$0xff] %vm869, %v1054
    %1071 = vst.msk [vmem:[#allocation5 + $0x48] sm:$0xff] %vm869, %v1055
    %1072 = vst.msk [vmem:[#allocation5 + $0x50] sm:$0xff] %vm869, %v1056
    %1073 = vst.msk [vmem:[#allocation5 + $0x58] sm:$0xff] %vm869, %v1057
    %1074 = vst.msk [vmem:[#allocation5 + $0x60] sm:$0xff] %vm869, %v1058
    %1075 = vst.msk [vmem:[#allocation5 + $0x68] sm:$0xff] %vm869, %v1059
    %1076 = vst.msk [vmem:[#allocation5 + $0x70] sm:$0xff] %vm869, %v1060
    %1077 = vst.msk [vmem:[#allocation5 + $0x78] sm:$0xff] %vm869, %v1061
    // Predicated region
    $region26: #{tpu_custom_call.1} parent=1 // pred_check
      %p1078 = pneg %p31
    $region27: #{tpu_custom_call.1} parent=1 // pred_check_branch
      %1080 = sbr.rel (%p1078) target = $region29
    $region28: #{tpu_custom_call.1} parent=1 // pred_region
      %v1081 = vld [vmem:[#allocation2] sm:$0xff]
      %v1082 = vld [vmem:[#allocation2 + $0x8] sm:$0xff]
      %v1083 = vld [vmem:[#allocation2 + $0x10] sm:$0xff]
      %v1084 = vld [vmem:[#allocation2 + $0x18] sm:$0xff]
      %v1085 = vld [vmem:[#allocation2 + $0x20] sm:$0xff]
      %v1086 = vld [vmem:[#allocation2 + $0x28] sm:$0xff]
      %v1087 = vld [vmem:[#allocation2 + $0x30] sm:$0xff]
      %v1088 = vld [vmem:[#allocation2 + $0x38] sm:$0xff]
      %v1089 = vld [vmem:[#allocation2 + $0x40] sm:$0xff]
      %v1090 = vld [vmem:[#allocation2 + $0x48] sm:$0xff]
      %v1091 = vld [vmem:[#allocation2 + $0x50] sm:$0xff]
      %v1092 = vld [vmem:[#allocation2 + $0x58] sm:$0xff]
      %v1093 = vld [vmem:[#allocation2 + $0x60] sm:$0xff]
      %v1094 = vld [vmem:[#allocation2 + $0x68] sm:$0xff]
      %v1095 = vld [vmem:[#allocation2 + $0x70] sm:$0xff]
      %v1096 = vld [vmem:[#allocation2 + $0x78] sm:$0xff]
      %v1097 = vld [vmem:[#allocation3] sm:$0xff]
      %v1098 = vld [vmem:[#allocation3 + $0x8] sm:$0xff]
      %v1099 = vld [vmem:[#allocation3 + $0x10] sm:$0xff]
      %v1100 = vld [vmem:[#allocation3 + $0x18] sm:$0xff]
      %v1101 = vld [vmem:[#allocation3 + $0x20] sm:$0xff]
      %v1102 = vld [vmem:[#allocation3 + $0x28] sm:$0xff]
      %v1103 = vld [vmem:[#allocation3 + $0x30] sm:$0xff]
      %v1104 = vld [vmem:[#allocation3 + $0x38] sm:$0xff]
      %v1105 = vld [vmem:[#allocation3 + $0x40] sm:$0xff]
      %v1106 = vld [vmem:[#allocation3 + $0x48] sm:$0xff]
      %v1107 = vld [vmem:[#allocation3 + $0x50] sm:$0xff]
      %v1108 = vld [vmem:[#allocation3 + $0x58] sm:$0xff]
      %v1109 = vld [vmem:[#allocation3 + $0x60] sm:$0xff]
      %v1110 = vld [vmem:[#allocation3 + $0x68] sm:$0xff]
      %v1111 = vld [vmem:[#allocation3 + $0x70] sm:$0xff]
      %v1112 = vld [vmem:[#allocation3 + $0x78] sm:$0xff]
      %v1113 = vlog2.pop %v1097
      %v1114 = vmul.f32 %v1113, 0.6931472
      %v1115 = vlog2.pop %v1098
      %v1116 = vmul.f32 %v1115, 0.6931472
      %v1117 = vlog2.pop %v1099
      %v1118 = vmul.f32 %v1117, 0.6931472
      %v1119 = vlog2.pop %v1100
      %v1120 = vmul.f32 %v1119, 0.6931472
      %v1121 = vlog2.pop %v1101
      %v1122 = vmul.f32 %v1121, 0.6931472
      %v1123 = vlog2.pop %v1102
      %v1124 = vmul.f32 %v1123, 0.6931472
      %v1125 = vlog2.pop %v1103
      %v1126 = vmul.f32 %v1125, 0.6931472
      %v1127 = vlog2.pop %v1104
      %v1128 = vmul.f32 %v1127, 0.6931472
      %v1129 = vlog2.pop %v1105
      %v1130 = vmul.f32 %v1129, 0.6931472
      %v1131 = vlog2.pop %v1106
      %v1132 = vmul.f32 %v1131, 0.6931472
      %v1133 = vlog2.pop %v1107
      %v1134 = vmul.f32 %v1133, 0.6931472
      %v1135 = vlog2.pop %v1108
      %v1136 = vmul.f32 %v1135, 0.6931472
      %v1137 = vlog2.pop %v1109
      %v1138 = vmul.f32 %v1137, 0.6931472
      %v1139 = vlog2.pop %v1110
      %v1140 = vmul.f32 %v1139, 0.6931472
      %v1141 = vlog2.pop %v1111
      %v1142 = vmul.f32 %v1141, 0.6931472
      %v1143 = vlog2.pop %v1112
      %v1144 = vmul.f32 %v1143, 0.6931472
      %v1145 = vadd.f32 %v1081, %v1114
      %v1146 = vadd.f32 %v1082, %v1116
      %v1147 = vadd.f32 %v1083, %v1118
      %v1148 = vadd.f32 %v1084, %v1120
      %v1149 = vadd.f32 %v1085, %v1122
      %v1150 = vadd.f32 %v1086, %v1124
      %v1151 = vadd.f32 %v1087, %v1126
      %v1152 = vadd.f32 %v1088, %v1128
      %v1153 = vadd.f32 %v1089, %v1130
      %v1154 = vadd.f32 %v1090, %v1132
      %v1155 = vadd.f32 %v1091, %v1134
      %v1156 = vadd.f32 %v1092, %v1136
      %v1157 = vadd.f32 %v1093, %v1138
      %v1158 = vadd.f32 %v1094, %v1140
      %v1159 = vadd.f32 %v1095, %v1142
      %v1160 = vadd.f32 %v1096, %v1144
      %v1161 = vld [vmem:[#allocation5] sm:$0xff]
      %v1162 = vld [vmem:[#allocation5 + $0x8] sm:$0xff]
      %v1163 = vld [vmem:[#allocation5 + $0x10] sm:$0xff]
      %v1164 = vld [vmem:[#allocation5 + $0x18] sm:$0xff]
      %v1165 = vld [vmem:[#allocation5 + $0x20] sm:$0xff]
      %v1166 = vld [vmem:[#allocation5 + $0x28] sm:$0xff]
      %v1167 = vld [vmem:[#allocation5 + $0x30] sm:$0xff]
      %v1168 = vld [vmem:[#allocation5 + $0x38] sm:$0xff]
      %v1169 = vld [vmem:[#allocation5 + $0x40] sm:$0xff]
      %v1170 = vld [vmem:[#allocation5 + $0x48] sm:$0xff]
      %v1171 = vld [vmem:[#allocation5 + $0x50] sm:$0xff]
      %v1172 = vld [vmem:[#allocation5 + $0x58] sm:$0xff]
      %v1173 = vld [vmem:[#allocation5 + $0x60] sm:$0xff]
      %v1174 = vld [vmem:[#allocation5 + $0x68] sm:$0xff]
      %v1175 = vld [vmem:[#allocation5 + $0x70] sm:$0xff]
      %v1176 = vld [vmem:[#allocation5 + $0x78] sm:$0xff]
      %v1177 = vld [vmem:[#allocation4] sm:$0xff]
      %v1178 = vld [vmem:[#allocation4 + $0x8] sm:$0xff]
      %v1179 = vld [vmem:[#allocation4 + $0x10] sm:$0xff]
      %v1180 = vld [vmem:[#allocation4 + $0x18] sm:$0xff]
      %v1181 = vld [vmem:[#allocation4 + $0x20] sm:$0xff]
      %v1182 = vld [vmem:[#allocation4 + $0x28] sm:$0xff]
      %v1183 = vld [vmem:[#allocation4 + $0x30] sm:$0xff]
      %v1184 = vld [vmem:[#allocation4 + $0x38] sm:$0xff]
      %v1185 = vld [vmem:[#allocation4 + $0x40] sm:$0xff]
      %v1186 = vld [vmem:[#allocation4 + $0x48] sm:$0xff]
      %v1187 = vld [vmem:[#allocation4 + $0x50] sm:$0xff]
      %v1188 = vld [vmem:[#allocation4 + $0x58] sm:$0xff]
      %v1189 = vld [vmem:[#allocation4 + $0x60] sm:$0xff]
      %v1190 = vld [vmem:[#allocation4 + $0x68] sm:$0xff]
      %v1191 = vld [vmem:[#allocation4 + $0x70] sm:$0xff]
      %v1192 = vld [vmem:[#allocation4 + $0x78] sm:$0xff]
      %v1193 = vmax.f32 %v1161, 1.0
      %v1194 = vmax.f32 %v1162, 1.0
      %v1195 = vmax.f32 %v1163, 1.0
      %v1196 = vmax.f32 %v1164, 1.0
      %v1197 = vmax.f32 %v1165, 1.0
      %v1198 = vmax.f32 %v1166, 1.0
      %v1199 = vmax.f32 %v1167, 1.0
      %v1200 = vmax.f32 %v1168, 1.0
      %v1201 = vmax.f32 %v1169, 1.0
      %v1202 = vmax.f32 %v1170, 1.0
      %v1203 = vmax.f32 %v1171, 1.0
      %v1204 = vmax.f32 %v1172, 1.0
      %v1205 = vmax.f32 %v1173, 1.0
      %v1206 = vmax.f32 %v1174, 1.0
      %v1207 = vmax.f32 %v1175, 1.0
      %v1208 = vmax.f32 %v1176, 1.0
      %v1209 = vrcp.pop %v1193
      %v1210 = vmul.f32 %v1177, %v1209
      %v1211 = vrcp.pop %v1194
      %v1212 = vmul.f32 %v1178, %v1211
      %v1213 = vrcp.pop %v1195
      %v1214 = vmul.f32 %v1179, %v1213
      %v1215 = vrcp.pop %v1196
      %v1216 = vmul.f32 %v1180, %v1215
      %v1217 = vrcp.pop %v1197
      %v1218 = vmul.f32 %v1181, %v1217
      %v1219 = vrcp.pop %v1198
      %v1220 = vmul.f32 %v1182, %v1219
      %v1221 = vrcp.pop %v1199
      %v1222 = vmul.f32 %v1183, %v1221
      %v1223 = vrcp.pop %v1200
      %v1224 = vmul.f32 %v1184, %v1223
      %v1225 = vrcp.pop %v1201
      %v1226 = vmul.f32 %v1185, %v1225
      %v1227 = vrcp.pop %v1202
      %v1228 = vmul.f32 %v1186, %v1227
      %v1229 = vrcp.pop %v1203
      %v1230 = vmul.f32 %v1187, %v1229
      %v1231 = vrcp.pop %v1204
      %v1232 = vmul.f32 %v1188, %v1231
      %v1233 = vrcp.pop %v1205
      %v1234 = vmul.f32 %v1189, %v1233
      %v1235 = vrcp.pop %v1206
      %v1236 = vmul.f32 %v1190, %v1235
      %v1237 = vrcp.pop %v1207
      %v1238 = vmul.f32 %v1191, %v1237
      %v1239 = vrcp.pop %v1208
      %v1240 = vmul.f32 %v1192, %v1239
      %v1241 = vsub.f32 %v1210, %v1145
      %v1242 = vsub.f32 %v1212, %v1146
      %v1243 = vsub.f32 %v1214, %v1147
      %v1244 = vsub.f32 %v1216, %v1148
      %v1245 = vsub.f32 %v1218, %v1149
      %v1246 = vsub.f32 %v1220, %v1150
      %v1247 = vsub.f32 %v1222, %v1151
      %v1248 = vsub.f32 %v1224, %v1152
      %v1249 = vsub.f32 %v1226, %v1153
      %v1250 = vsub.f32 %v1228, %v1154
      %v1251 = vsub.f32 %v1230, %v1155
      %v1252 = vsub.f32 %v1232, %v1156
      %v1253 = vsub.f32 %v1234, %v1157
      %v1254 = vsub.f32 %v1236, %v1158
      %v1255 = vsub.f32 %v1238, %v1159
      %v1256 = vsub.f32 %v1240, %v1160
      %vm1257 = vcmp.gt.f32.partialorder %v1161, 0.0
      %vm1258 = vcmp.gt.f32.partialorder %v1162, 0.0
      %vm1259 = vcmp.gt.f32.partialorder %v1163, 0.0
      %vm1260 = vcmp.gt.f32.partialorder %v1164, 0.0
      %vm1261 = vcmp.gt.f32.partialorder %v1165, 0.0
      %vm1262 = vcmp.gt.f32.partialorder %v1166, 0.0
      %vm1263 = vcmp.gt.f32.partialorder %v1167, 0.0
      %vm1264 = vcmp.gt.f32.partialorder %v1168, 0.0
      %vm1265 = vcmp.gt.f32.partialorder %v1169, 0.0
      %vm1266 = vcmp.gt.f32.partialorder %v1170, 0.0
      %vm1267 = vcmp.gt.f32.partialorder %v1171, 0.0
      %vm1268 = vcmp.gt.f32.partialorder %v1172, 0.0
      %vm1269 = vcmp.gt.f32.partialorder %v1173, 0.0
      %vm1270 = vcmp.gt.f32.partialorder %v1174, 0.0
      %vm1271 = vcmp.gt.f32.partialorder %v1175, 0.0
      %vm1272 = vcmp.gt.f32.partialorder %v1176, 0.0
      %v1273 = vsub.f32 0.0, %v1241
      %v1274 = vsub.f32 0.0, %v1242
      %v1275 = vsub.f32 0.0, %v1243
      %v1276 = vsub.f32 0.0, %v1244
      %v1277 = vsub.f32 0.0, %v1245
      %v1278 = vsub.f32 0.0, %v1246
      %v1279 = vsub.f32 0.0, %v1247
      %v1280 = vsub.f32 0.0, %v1248
      %v1281 = vsub.f32 0.0, %v1249
      %v1282 = vsub.f32 0.0, %v1250
      %v1283 = vsub.f32 0.0, %v1251
      %v1284 = vsub.f32 0.0, %v1252
      %v1285 = vsub.f32 0.0, %v1253
      %v1286 = vsub.f32 0.0, %v1254
      %v1287 = vsub.f32 0.0, %v1255
      %v1288 = vsub.f32 0.0, %v1256
      %v1289 = vsel %vm1257, %v1273, 0.0
      %v1290 = vsel %vm1258, %v1274, 0.0
      %v1291 = vsel %vm1259, %v1275, 0.0
      %v1292 = vsel %vm1260, %v1276, 0.0
      %v1293 = vsel %vm1261, %v1277, 0.0
      %v1294 = vsel %vm1262, %v1278, 0.0
      %v1295 = vsel %vm1263, %v1279, 0.0
      %v1296 = vsel %vm1264, %v1280, 0.0
      %v1297 = vsel %vm1265, %v1281, 0.0
      %v1298 = vsel %vm1266, %v1282, 0.0
      %v1299 = vsel %vm1267, %v1283, 0.0
      %v1300 = vsel %vm1268, %v1284, 0.0
      %v1301 = vsel %vm1269, %v1285, 0.0
      %v1302 = vsel %vm1270, %v1286, 0.0
      %v1303 = vsel %vm1271, %v1287, 0.0
      %v1304 = vsel %vm1272, %v1288, 0.0
      %1305 = vst.msk [vmem:[%s4] sm:$0xff] %vm869, %v1289
      %1306 = vst.msk [vmem:[%s4 + $0x8] sm:$0xff] %vm869, %v1290
      %1307 = vst.msk [vmem:[%s4 + $0x10] sm:$0xff] %vm869, %v1291
      %1308 = vst.msk [vmem:[%s4 + $0x18] sm:$0xff] %vm869, %v1292
      %1309 = vst.msk [vmem:[%s4 + $0x20] sm:$0xff] %vm869, %v1293
      %1310 = vst.msk [vmem:[%s4 + $0x28] sm:$0xff] %vm869, %v1294
      %1311 = vst.msk [vmem:[%s4 + $0x30] sm:$0xff] %vm869, %v1295
      %1312 = vst.msk [vmem:[%s4 + $0x38] sm:$0xff] %vm869, %v1296
      %1313 = vst.msk [vmem:[%s4 + $0x40] sm:$0xff] %vm869, %v1297
      %1314 = vst.msk [vmem:[%s4 + $0x48] sm:$0xff] %vm869, %v1298
      %1315 = vst.msk [vmem:[%s4 + $0x50] sm:$0xff] %vm869, %v1299
      %1316 = vst.msk [vmem:[%s4 + $0x58] sm:$0xff] %vm869, %v1300
      %1317 = vst.msk [vmem:[%s4 + $0x60] sm:$0xff] %vm869, %v1301
      %1318 = vst.msk [vmem:[%s4 + $0x68] sm:$0xff] %vm869, %v1302
      %1319 = vst.msk [vmem:[%s4 + $0x70] sm:$0xff] %vm869, %v1303
      %1320 = vst.msk [vmem:[%s4 + $0x78] sm:$0xff] %vm869, %v1304
    $region29: #{tpu_custom_call.1} parent=1 // pred_fallthru
      _
    // Predicated region
    $region30: #{tpu_custom_call.1} parent=1 // pred_check
      _
    $region31: #{tpu_custom_call.1} parent=1 // pred_check_branch
      %1322 = sbr.rel (0) target = $region33
    $region32: #{tpu_custom_call.1} parent=1 // pred_region
      _
    $region33: #{tpu_custom_call.1} parent=1 // pred_fallthru
      _
    // Predicated region
    $region34: #{tpu_custom_call.1} parent=1 // pred_check
      _
    $region35: #{tpu_custom_call.1} parent=1 // pred_check_branch
      %1324 = sbr.rel (0) target = $region37
    $region36: #{tpu_custom_call.1} parent=1 // pred_region
      _
    $region37: #{tpu_custom_call.1} parent=1 // pred_fallthru
      _
    %1325 = vsyncpa [#allocation7], 1

</llo_original>
